<compile_context>
chip_gen: v5e
topology: v5e:2x2
jax: 0.10.0
libtpu: 0.0.40
codegen_flags: <defaults>
</compile_context>

<pallas_src>
import numpy as np
import jax
import jax.numpy as jnp
from jax import lax
from jax.experimental import pallas as pl
from jax.experimental.pallas import tpu as pltpu

EPS = 1e-5


# --------------------------------------------------------------------------------------
# Host-side constant builders (one-time, tiny)
# --------------------------------------------------------------------------------------
def _conv_sel(bt, l_in, l_out, stride):
    """Selection matrix fusing the 3 conv taps + stride + block-diag batch.

    out_flat = SEL @ vstack([H@W0, H@W1, H@W2]);  SEL: (bt*l_out, 3*bt*l_in)."""
    m_in = bt * l_in
    sel = np.zeros((bt * l_out, 3 * m_in), np.float32)
    for b in range(bt):
        for lo in range(l_out):
            for k in range(3):
                li = stride * lo + k
                sel[b * l_out + lo, k * m_in + b * l_in + li] = 1.0
    return jnp.asarray(sel)


def _row_expand2(bt, l):
    """Block-diag(2x) per-sample row membership for GroupNorm stats / broadcast.

    rm2: (2*bt*l, 2*bt); also returns its transpose."""
    rm = np.kron(np.eye(bt, dtype=np.float32), np.ones((l, 1), np.float32))
    z = np.zeros_like(rm)
    rm2 = np.block([[rm, z], [z, rm]])
    return jnp.asarray(rm2), jnp.asarray(np.ascontiguousarray(rm2.T))


def _group_membership(c, g):
    """Channel->group membership (c, g) and its transpose."""
    gm = np.kron(np.eye(g, dtype=np.float32), np.ones((c // g, 1), np.float32))
    return jnp.asarray(gm), jnp.asarray(np.ascontiguousarray(gm.T))


def _out_sel(bt, l3):
    """Row-gather matrices for the output flatten: selo[l][b, b*l3+l] = 1."""
    selo = np.zeros((l3, bt, bt * l3), np.float32)
    for l in range(l3):
        for b in range(bt):
            selo[l, b, b * l3 + l] = 1.0
    return jnp.asarray(selo)


# --------------------------------------------------------------------------------------
# Kernel
# --------------------------------------------------------------------------------------
def cnn_embedder_kernel(b_ref, x_ref,
                        w1_ref, sel1_ref, rmt1_ref, rm1_ref, gm1_ref, gmt1_ref, g1w_ref, g1b_ref,
                        w2_ref, sel2_ref, rmt2_ref, rm2_ref, gm2_ref, gmt2_ref, g2w_ref, g2b_ref,
                        w3_ref, sel3_ref, rmt3_ref, rm3_ref, gm3_ref, gmt3_ref, g3w_ref, g3b_ref,
                        selo_ref, sw1_ref, sb1_ref, sw2_ref, sb2_ref, ow_ref, ob_ref,
                        out_ref):
    x = x_ref[...]          # (bt*L0, C_in)  channel-last, batch-flattened
    bblk = b_ref[...]       # (bt, S)

    def conv(h, w_ref, sel_ref):
        # h: (bt*L_in, C_in); w_ref: (3, C_in, C_out); sel_ref: (bt*L_out, 3*bt*L_in)
        hw = [jnp.dot(h, w_ref[k], preferred_element_type=jnp.float32) for k in range(3)]
        hw = jnp.concatenate(hw, axis=0)                                   # (3*bt*L_in, C_out)
        return jnp.dot(sel_ref[...], hw, preferred_element_type=jnp.float32)

    def gnorm(h, rmt_ref, rm_ref, gm_ref, gmt_ref, gw_ref, gb_ref):
        # h: (m, C) with m = bt * L
        m, c = h.shape
        bt = rm_ref.shape[1] // 2
        g = gm_ref.shape[1]
        n_inv = 1.0 / float((c // g) * (m // bt))
        xx = jnp.concatenate([h, h * h], axis=0)                           # (2m, C)
        t = jnp.dot(rmt_ref[...], xx, preferred_element_type=jnp.float32)  # (2bt, C)
        tg = jnp.dot(t, gm_ref[...], preferred_element_type=jnp.float32) * n_inv  # (2bt, G)
        mean = tg[:bt]
        var = jnp.maximum(tg[bt:] - mean * mean, 0.0)                      # clamp cancellation
        inv = lax.rsqrt(var + EPS)
        mi = jnp.concatenate([mean, inv], axis=0)                          # (2bt, G)
        mic = jnp.dot(mi, gmt_ref[...], preferred_element_type=jnp.float32)    # (2bt, C)
        full = jnp.dot(rm_ref[...], mic, preferred_element_type=jnp.float32)   # (2m, C)
        return (h - full[:m]) * full[m:] * gw_ref[...] + gb_ref[...]

    def silu(h):
        return h * jax.nn.sigmoid(h)

    h1 = silu(gnorm(conv(x, w1_ref, sel1_ref), rmt1_ref, rm1_ref, gm1_ref, gmt1_ref,
                    g1w_ref, g1b_ref))
    h2 = silu(gnorm(conv(h1, w2_ref, sel2_ref), rmt2_ref, rm2_ref, gm2_ref, gmt2_ref,
                    g2w_ref, g2b_ref))
    h3 = silu(gnorm(conv(h2, w3_ref, sel3_ref), rmt3_ref, rm3_ref, gm3_ref, gmt3_ref,
                    g3w_ref, g3b_ref))                                     # (bt*L3, C3)

    # static branch: Linear -> ReLU -> Linear
    e = jnp.dot(bblk, sw1_ref[...], preferred_element_type=jnp.float32) + sb1_ref[...]
    e = jnp.maximum(e, 0.0)
    e = jnp.dot(e, sw2_ref[...], preferred_element_type=jnp.float32) + sb2_ref[...]  # (bt, 32)

    # output projection: gather per-position rows, lane-concat, one K = L3*C3+32 matmul
    l3 = selo_ref.shape[0]
    parts = [jnp.dot(selo_ref[l], h3, preferred_element_type=jnp.float32) for l in range(l3)]
    feat = jnp.concatenate(parts + [e], axis=1)                            # (bt, L3*C3 + 32)
    out_ref[...] = jnp.dot(feat, ow_ref[...], preferred_element_type=jnp.float32) + ob_ref[...]


# --------------------------------------------------------------------------------------
# Wrapper
# --------------------------------------------------------------------------------------
def cnn_embedder(b_in, x, params, *, batch_tile=None):
    B, C_in, L0 = x.shape
    S = b_in.shape[-1]
    c1, c2, c3 = params["w1"].shape[2], params["w2"].shape[2], params["w3"].shape[2]
    E = params["ob"].shape[-1]
    L1 = L0 - 2
    L2 = (L1 - 3) // 2 + 1
    L3 = (L2 - 3) // 2 + 1

    bt = batch_tile if batch_tile is not None else (8 if B >= 8 else B)
    B_pad = ((B + bt - 1) // bt) * bt

    # channel-last, batch-flattened temporal input; zero-pad batch to a tile multiple
    x_cl = jnp.transpose(x, (0, 2, 1)).reshape(B * L0, C_in)
    if B_pad != B:
        x_cl = jnp.concatenate(
            [x_cl, jnp.zeros(((B_pad - B) * L0, C_in), x_cl.dtype)], axis=0)
        b_p = jnp.concatenate([b_in, jnp.zeros((B_pad - B, S), b_in.dtype)], axis=0)
    else:
        b_p = b_in

    # precomputed constants (VMEM-resident across the grid)
    sel1 = _conv_sel(bt, L0, L1, 1)
    sel2 = _conv_sel(bt, L1, L2, 2)
    sel3 = _conv_sel(bt, L2, L3, 2)
    rm1, rmt1 = _row_expand2(bt, L1)
    rm2m, rmt2 = _row_expand2(bt, L2)
    rm3, rmt3 = _row_expand2(bt, L3)
    gm1, gmt1 = _group_membership(c1, 4)
    gm2, gmt2 = _group_membership(c2, 32)
    gm3, gmt3 = _group_membership(c3, 32)
    selo = _out_sel(bt, L3)

    # permute the output weight so rows match the kernel's (l-major, c-minor) concat
    ow_full = params["ow_full"]
    ow_h = ow_full[: c3 * L3].reshape(c3, L3, E).transpose(1, 0, 2).reshape(L3 * c3, E)
    ow_perm = jnp.concatenate([ow_h, ow_full[c3 * L3:]], axis=0)

    consts = [
        params["w1"], sel1, rmt1, rm1, gm1, gmt1, params["g1w"], params["g1b"],
        params["w2"], sel2, rmt2, rm2m, gm2, gmt2, params["g2w"], params["g2b"],
        params["w3"], sel3, rmt3, rm3, gm3, gmt3, params["g3w"], params["g3b"],
        selo, params["sw1"], params["sb1"], params["sw2"], params["sb2"], ow_perm, params["ob"],
    ]

    def full_spec(a):
        n = a.ndim
        return pl.BlockSpec(a.shape, lambda i, _n=n: (0,) * _n)

    grid_spec = pltpu.PrefetchScalarGridSpec(
        num_scalar_prefetch=0,
        grid=(B_pad // bt,),
        in_specs=[
            pl.BlockSpec((bt, S), lambda i: (i, 0)),          # static features
            pl.BlockSpec((bt * L0, C_in), lambda i: (i, 0)),  # temporal input (flat, ch-last)
        ] + [full_spec(c) for c in consts],
        out_specs=pl.BlockSpec((bt, E), lambda i: (i, 0)),
    )

    flops_per_sample = (
        2 * 3 * C_in * c1 * L1 + 2 * 3 * c1 * c2 * L2 + 2 * 3 * c2 * c3 * L3
        + 2 * (S * 64 + 64 * 32) + 2 * (L3 * c3 + 32) * E
    )
    transc_per_sample = c1 * L1 + c2 * L2 + c3 * L3 + 3 * 32
    bytes_accessed = 4 * (int(x_cl.size) + int(b_p.size) + B_pad * E
                          + sum(int(c.size) for c in consts))
    cost = pl.CostEstimate(flops=int(B_pad * flops_per_sample),
                           transcendentals=int(B_pad * transc_per_sample),
                           bytes_accessed=int(bytes_accessed))

    out = pl.pallas_call(
        cnn_embedder_kernel,
        out_shape=jax.ShapeDtypeStruct((B_pad, E), jnp.float32),
        grid_spec=grid_spec,
        compiler_params=pltpu.CompilerParams(dimension_semantics=("parallel",)),
        cost_estimate=cost,
    )(b_p, x_cl, *consts)
    return out[:B]


# --------------------------------------------------------------------------------------
# Parameters + pure-JAX reference (mirrors the PyTorch module)
# --------------------------------------------------------------------------------------
def init_params(key, channels=(32, 64, 128), conditional_dim=4, conditional_len=16,
                embed_dim=32, static_dim=8):
    c1, c2, c3 = channels
    L1 = conditional_len - 2
    L2 = (L1 - 3) // 2 + 1
    L3 = (L2 - 3) // 2 + 1            # matches int(out_len) in the PyTorch __init__
    ks = jax.random.split(key, 13)

    def nrm(k, shape, fan_in):
        return (jax.random.normal(k, shape, jnp.float32) / jnp.sqrt(fan_in)).astype(jnp.float32)

    p = {}
    p["w1"] = nrm(ks[0], (3, conditional_dim, c1), 3 * conditional_dim)  # (k, C_in, C_out)
    p["w2"] = nrm(ks[1], (3, c1, c2), 3 * c1)
    p["w3"] = nrm(ks[2], (3, c2, c3), 3 * c2)
    p["g1w"] = 1.0 + 0.1 * jax.random.normal(ks[3], (1, c1), jnp.float32)
    p["g1b"] = 0.1 * jax.random.normal(ks[4], (1, c1), jnp.float32)
    p["g2w"] = 1.0 + 0.1 * jax.random.normal(ks[5], (1, c2), jnp.float32)
    p["g2b"] = 0.1 * jax.random.normal(ks[6], (1, c2), jnp.float32)
    p["g3w"] = 1.0 + 0.1 * jax.random.normal(ks[7], (1, c3), jnp.float32)
    p["g3b"] = 0.1 * jax.random.normal(ks[8], (1, c3), jnp.float32)
    p["sw1"] = nrm(ks[9], (static_dim, 64), static_dim)
    p["sb1"] = jnp.zeros((1, 64), jnp.float32)
    p["sw2"] = nrm(ks[10], (64, 32), 64)
    p["sb2"] = jnp.zeros((1, 32), jnp.float32)
    p["ow_full"] = nrm(ks[11], (c3 * L3 + 32, embed_dim), c3 * L3 + 32)
    p["ob"] = 0.1 * jax.random.normal(ks[12], (1, embed_dim), jnp.float32)
    return p, L3


def reference(b_in, x, params):
    """Pure-JAX reference mirroring the PyTorch forward."""
    def conv(h, w, stride):
        w_oiw = jnp.transpose(w, (2, 1, 0))  # (k, Ci, Co) -> (Co, Ci, k)
        dn = lax.conv_dimension_numbers(h.shape, w_oiw.shape, ("NCH", "OIH", "NCH"))
        return lax.conv_general_dilated(h, w_oiw, (stride,), "VALID", dimension_numbers=dn)

    def gn(h, G, gw, gb):
        B, C, L = h.shape
        gs = C // G
        hg = h.reshape(B, G, gs * L)
        mean = hg.mean(-1, keepdims=True)
        var = hg.var(-1, keepdims=True)
        hn = ((hg - mean) / jnp.sqrt(var + EPS)).reshape(B, C, L)
        return hn * gw.reshape(1, C, 1) + gb.reshape(1, C, 1)

    silu = lambda h: h * jax.nn.sigmoid(h)
    h1 = silu(gn(conv(x, params["w1"], 1), 4, params["g1w"], params["g1b"]))
    h2 = silu(gn(conv(h1, params["w2"], 2), 32, params["g2w"], params["g2b"]))
    h3 = silu(gn(conv(h2, params["w3"], 2), 32, params["g3w"], params["g3b"]))
    h3f = h3.reshape(h3.shape[0], -1)
    e = jnp.maximum(b_in @ params["sw1"] + params["sb1"], 0.0) @ params["sw2"] + params["sb2"]
    return jnp.concatenate([h3f, e], -1) @ params["ow_full"] + params["ob"]


if __name__ == "__main__":
    B, C_in, L0 = 2, 4, 16
    static_dim, embed_dim = 8, 32

    key = jax.random.PRNGKey(0)
    kp, kb, kx = jax.random.split(key, 3)
    params, _ = init_params(kp, conditional_dim=C_in, conditional_len=L0,
                            embed_dim=embed_dim, static_dim=static_dim)
    b_in = jax.random.normal(kb, (B, static_dim), jnp.float32)
    x = jax.random.normal(kx, (B, C_in, L0), jnp.float32)

    out = jax.block_until_ready(cnn_embedder(b_in, x, params))
    ref = reference(b_in, x, params)
    assert out.shape == (B, embed_dim), out.shape
    max_err = float(jnp.max(jnp.abs(out - ref)))
    assert jnp.allclose(out, ref, atol=2e-3, rtol=2e-3), max_err
    print("KERNEL_OK")
</pallas_src>

<mosaic_0001>
module attributes {stable_mosaic.version = 11 : i64} {
  func.func @cnn_embedder_kernel(%arg0: i32, %arg1: memref<2x8xf32, #tpu.memory_space<vmem>>, %arg2: memref<32x4xf32, #tpu.memory_space<vmem>>, %arg3: memref<3x4x32xf32, #tpu.memory_space<vmem>>, %arg4: memref<28x96xf32, #tpu.memory_space<vmem>>, %arg5: memref<4x56xf32, #tpu.memory_space<vmem>>, %arg6: memref<56x4xf32, #tpu.memory_space<vmem>>, %arg7: memref<32x4xf32, #tpu.memory_space<vmem>>, %arg8: memref<4x32xf32, #tpu.memory_space<vmem>>, %arg9: memref<1x32xf32, #tpu.memory_space<vmem>>, %arg10: memref<1x32xf32, #tpu.memory_space<vmem>>, %arg11: memref<3x32x64xf32, #tpu.memory_space<vmem>>, %arg12: memref<12x84xf32, #tpu.memory_space<vmem>>, %arg13: memref<4x24xf32, #tpu.memory_space<vmem>>, %arg14: memref<24x4xf32, #tpu.memory_space<vmem>>, %arg15: memref<64x32xf32, #tpu.memory_space<vmem>>, %arg16: memref<32x64xf32, #tpu.memory_space<vmem>>, %arg17: memref<1x64xf32, #tpu.memory_space<vmem>>, %arg18: memref<1x64xf32, #tpu.memory_space<vmem>>, %arg19: memref<3x64x128xf32, #tpu.memory_space<vmem>>, %arg20: memref<4x36xf32, #tpu.memory_space<vmem>>, %arg21: memref<4x8xf32, #tpu.memory_space<vmem>>, %arg22: memref<8x4xf32, #tpu.memory_space<vmem>>, %arg23: memref<128x32xf32, #tpu.memory_space<vmem>>, %arg24: memref<32x128xf32, #tpu.memory_space<vmem>>, %arg25: memref<1x128xf32, #tpu.memory_space<vmem>>, %arg26: memref<1x128xf32, #tpu.memory_space<vmem>>, %arg27: memref<2x2x4xf32, #tpu.memory_space<vmem>>, %arg28: memref<8x64xf32, #tpu.memory_space<vmem>>, %arg29: memref<1x64xf32, #tpu.memory_space<vmem>>, %arg30: memref<64x32xf32, #tpu.memory_space<vmem>>, %arg31: memref<1x32xf32, #tpu.memory_space<vmem>>, %arg32: memref<288x32xf32, #tpu.memory_space<vmem>>, %arg33: memref<1x32xf32, #tpu.memory_space<vmem>>, %arg34: memref<2x32xf32, #tpu.memory_space<vmem>>) attributes {dimension_semantics = [#tpu.dimension_semantics<parallel>], iteration_bounds = array<i64: 1>, scalar_prefetch = 0 : i64, scratch_operands = 0 : i64, tpu.core_type = #tpu.core_type<tc>, window_params = [{transform_indices = @transform_0, window_bounds = array<i64: 2, 8>}, {transform_indices = @transform_1, window_bounds = array<i64: 32, 4>}, {pipeline_mode = #tpu.pipeline_mode<synchronous>, transform_indices = @transform_2, window_bounds = array<i64: 3, 4, 32>}, {pipeline_mode = #tpu.pipeline_mode<synchronous>, transform_indices = @transform_3, window_bounds = array<i64: 28, 96>}, {pipeline_mode = #tpu.pipeline_mode<synchronous>, transform_indices = @transform_4, window_bounds = array<i64: 4, 56>}, {pipeline_mode = #tpu.pipeline_mode<synchronous>, transform_indices = @transform_5, window_bounds = array<i64: 56, 4>}, {pipeline_mode = #tpu.pipeline_mode<synchronous>, transform_indices = @transform_6, window_bounds = array<i64: 32, 4>}, {pipeline_mode = #tpu.pipeline_mode<synchronous>, transform_indices = @transform_7, window_bounds = array<i64: 4, 32>}, {pipeline_mode = #tpu.pipeline_mode<synchronous>, transform_indices = @transform_8, window_bounds = array<i64: 1, 32>}, {pipeline_mode = #tpu.pipeline_mode<synchronous>, transform_indices = @transform_9, window_bounds = array<i64: 1, 32>}, {pipeline_mode = #tpu.pipeline_mode<synchronous>, transform_indices = @transform_10, window_bounds = array<i64: 3, 32, 64>}, {pipeline_mode = #tpu.pipeline_mode<synchronous>, transform_indices = @transform_11, window_bounds = array<i64: 12, 84>}, {pipeline_mode = #tpu.pipeline_mode<synchronous>, transform_indices = @transform_12, window_bounds = array<i64: 4, 24>}, {pipeline_mode = #tpu.pipeline_mode<synchronous>, transform_indices = @transform_13, window_bounds = array<i64: 24, 4>}, {pipeline_mode = #tpu.pipeline_mode<synchronous>, transform_indices = @transform_14, window_bounds = array<i64: 64, 32>}, {pipeline_mode = #tpu.pipeline_mode<synchronous>, transform_indices = @transform_15, window_bounds = array<i64: 32, 64>}, {pipeline_mode = #tpu.pipeline_mode<synchronous>, transform_indices = @transform_16, window_bounds = array<i64: 1, 64>}, {pipeline_mode = #tpu.pipeline_mode<synchronous>, transform_indices = @transform_17, window_bounds = array<i64: 1, 64>}, {pipeline_mode = #tpu.pipeline_mode<synchronous>, transform_indices = @transform_18, window_bounds = array<i64: 3, 64, 128>}, {pipeline_mode = #tpu.pipeline_mode<synchronous>, transform_indices = @transform_19, window_bounds = array<i64: 4, 36>}, {pipeline_mode = #tpu.pipeline_mode<synchronous>, transform_indices = @transform_20, window_bounds = array<i64: 4, 8>}, {pipeline_mode = #tpu.pipeline_mode<synchronous>, transform_indices = @transform_21, window_bounds = array<i64: 8, 4>}, {pipeline_mode = #tpu.pipeline_mode<synchronous>, transform_indices = @transform_22, window_bounds = array<i64: 128, 32>}, {pipeline_mode = #tpu.pipeline_mode<synchronous>, transform_indices = @transform_23, window_bounds = array<i64: 32, 128>}, {pipeline_mode = #tpu.pipeline_mode<synchronous>, transform_indices = @transform_24, window_bounds = array<i64: 1, 128>}, {pipeline_mode = #tpu.pipeline_mode<synchronous>, transform_indices = @transform_25, window_bounds = array<i64: 1, 128>}, {pipeline_mode = #tpu.pipeline_mode<synchronous>, transform_indices = @transform_26, window_bounds = array<i64: 2, 2, 4>}, {pipeline_mode = #tpu.pipeline_mode<synchronous>, transform_indices = @transform_27, window_bounds = array<i64: 8, 64>}, {pipeline_mode = #tpu.pipeline_mode<synchronous>, transform_indices = @transform_28, window_bounds = array<i64: 1, 64>}, {pipeline_mode = #tpu.pipeline_mode<synchronous>, transform_indices = @transform_29, window_bounds = array<i64: 64, 32>}, {pipeline_mode = #tpu.pipeline_mode<synchronous>, transform_indices = @transform_30, window_bounds = array<i64: 1, 32>}, {pipeline_mode = #tpu.pipeline_mode<synchronous>, transform_indices = @transform_31, window_bounds = array<i64: 288, 32>}, {pipeline_mode = #tpu.pipeline_mode<synchronous>, transform_indices = @transform_32, window_bounds = array<i64: 1, 32>}, {transform_indices = @transform_33, window_bounds = array<i64: 2, 32>}]} {
    %c0 = arith.constant 0 : index
    %c0_0 = arith.constant 0 : index
    %0 = vector.load %arg2[%c0, %c0_0] : memref<32x4xf32, #tpu.memory_space<vmem>>, vector<32x4xf32>
    %c0_1 = arith.constant 0 : index
    %c0_2 = arith.constant 0 : index
    %1 = vector.load %arg1[%c0_1, %c0_2] : memref<2x8xf32, #tpu.memory_space<vmem>>, vector<2x8xf32>
    %c0_3 = arith.constant 0 : index
    %c0_4 = arith.constant 0 : index
    %c0_5 = arith.constant 0 : index
    %2 = vector.load %arg3[%c0_3, %c0_4, %c0_5] : memref<3x4x32xf32, #tpu.memory_space<vmem>>, vector<1x4x32xf32>
    %3 = vector.shape_cast %2 : vector<1x4x32xf32> to vector<4x32xf32>
    %cst = arith.constant dense<0.000000e+00> : vector<32x32xf32>
    %4 = tpu.matmul %0, %3, %cst {dimension_numbers = #tpu.dot_dimension_numbers<[1], [0], [0], [1], [0, 0, 1, 1], [], []>} : vector<32x4xf32>, vector<4x32xf32>, vector<32x32xf32> -> vector<32x32xf32>
    %c1 = arith.constant 1 : index
    %c0_6 = arith.constant 0 : index
    %c0_7 = arith.constant 0 : index
    %5 = vector.load %arg3[%c1, %c0_6, %c0_7] : memref<3x4x32xf32, #tpu.memory_space<vmem>>, vector<1x4x32xf32>
    %6 = vector.shape_cast %5 : vector<1x4x32xf32> to vector<4x32xf32>
    %cst_8 = arith.constant dense<0.000000e+00> : vector<32x32xf32>
    %7 = tpu.matmul %0, %6, %cst_8 {dimension_numbers = #tpu.dot_dimension_numbers<[1], [0], [0], [1], [0, 0, 1, 1], [], []>} : vector<32x4xf32>, vector<4x32xf32>, vector<32x32xf32> -> vector<32x32xf32>
    %c2 = arith.constant 2 : index
    %c0_9 = arith.constant 0 : index
    %c0_10 = arith.constant 0 : index
    %8 = vector.load %arg3[%c2, %c0_9, %c0_10] : memref<3x4x32xf32, #tpu.memory_space<vmem>>, vector<1x4x32xf32>
    %9 = vector.shape_cast %8 : vector<1x4x32xf32> to vector<4x32xf32>
    %cst_11 = arith.constant dense<0.000000e+00> : vector<32x32xf32>
    %10 = tpu.matmul %0, %9, %cst_11 {dimension_numbers = #tpu.dot_dimension_numbers<[1], [0], [0], [1], [0, 0, 1, 1], [], []>} : vector<32x4xf32>, vector<4x32xf32>, vector<32x32xf32> -> vector<32x32xf32>
    %11 = tpu.concatenate %4, %7, %10 in 0 : vector<32x32xf32>, vector<32x32xf32>, vector<32x32xf32> -> vector<96x32xf32>
    %c0_12 = arith.constant 0 : index
    %c0_13 = arith.constant 0 : index
    %12 = vector.load %arg4[%c0_12, %c0_13] : memref<28x96xf32, #tpu.memory_space<vmem>>, vector<28x96xf32>
    %cst_14 = arith.constant dense<0.000000e+00> : vector<28x32xf32>
    %13 = tpu.matmul %12, %11, %cst_14 {dimension_numbers = #tpu.dot_dimension_numbers<[1], [0], [0], [1], [0, 0, 1, 1], [], []>} : vector<28x96xf32>, vector<96x32xf32>, vector<28x32xf32> -> vector<28x32xf32>
    %14 = arith.mulf %13, %13 : vector<28x32xf32>
    %15 = tpu.concatenate %13, %14 in 0 : vector<28x32xf32>, vector<28x32xf32> -> vector<56x32xf32>
    %c0_15 = arith.constant 0 : index
    %c0_16 = arith.constant 0 : index
    %16 = vector.load %arg5[%c0_15, %c0_16] : memref<4x56xf32, #tpu.memory_space<vmem>>, vector<4x56xf32>
    %cst_17 = arith.constant dense<0.000000e+00> : vector<4x32xf32>
    %17 = tpu.matmul %16, %15, %cst_17 {dimension_numbers = #tpu.dot_dimension_numbers<[1], [0], [0], [1], [0, 0, 1, 1], [], []>} : vector<4x56xf32>, vector<56x32xf32>, vector<4x32xf32> -> vector<4x32xf32>
    %c0_18 = arith.constant 0 : index
    %c0_19 = arith.constant 0 : index
    %18 = vector.load %arg7[%c0_18, %c0_19] : memref<32x4xf32, #tpu.memory_space<vmem>>, vector<32x4xf32>
    %cst_20 = arith.constant dense<0.000000e+00> : vector<4x4xf32>
    %19 = tpu.matmul %17, %18, %cst_20 {dimension_numbers = #tpu.dot_dimension_numbers<[1], [0], [0], [1], [0, 0, 1, 1], [], []>} : vector<4x32xf32>, vector<32x4xf32>, vector<4x4xf32> -> vector<4x4xf32>
    %cst_21 = arith.constant 0.00892857183 : f32
    %20 = vector.broadcast %cst_21 : f32 to vector<4x4xf32>
    %21 = arith.mulf %19, %20 : vector<4x4xf32>
    %22 = vector.extract_strided_slice %21 {offsets = [0, 0], sizes = [2, 4], strides = [1, 1]} : vector<4x4xf32> to vector<2x4xf32>
    %23 = vector.extract_strided_slice %21 {offsets = [2, 0], sizes = [2, 4], strides = [1, 1]} : vector<4x4xf32> to vector<2x4xf32>
    %24 = arith.mulf %22, %22 : vector<2x4xf32>
    %25 = arith.subf %23, %24 : vector<2x4xf32>
    %cst_22 = arith.constant 0.000000e+00 : f32
    %26 = vector.broadcast %cst_22 : f32 to vector<2x4xf32>
    %27 = arith.maximumf %25, %26 : vector<2x4xf32>
    %cst_23 = arith.constant 9.99999974E-6 : f32
    %28 = vector.broadcast %cst_23 : f32 to vector<2x4xf32>
    %29 = arith.addf %27, %28 : vector<2x4xf32>
    %30 = math.rsqrt %29 : vector<2x4xf32>
    %31 = tpu.concatenate %22, %30 in 0 : vector<2x4xf32>, vector<2x4xf32> -> vector<4x4xf32>
    %c0_24 = arith.constant 0 : index
    %c0_25 = arith.constant 0 : index
    %32 = vector.load %arg8[%c0_24, %c0_25] : memref<4x32xf32, #tpu.memory_space<vmem>>, vector<4x32xf32>
    %cst_26 = arith.constant dense<0.000000e+00> : vector<4x32xf32>
    %33 = tpu.matmul %31, %32, %cst_26 {dimension_numbers = #tpu.dot_dimension_numbers<[1], [0], [0], [1], [0, 0, 1, 1], [], []>} : vector<4x4xf32>, vector<4x32xf32>, vector<4x32xf32> -> vector<4x32xf32>
    %c0_27 = arith.constant 0 : index
    %c0_28 = arith.constant 0 : index
    %34 = vector.load %arg6[%c0_27, %c0_28] : memref<56x4xf32, #tpu.memory_space<vmem>>, vector<56x4xf32>
    %cst_29 = arith.constant dense<0.000000e+00> : vector<56x32xf32>
    %35 = tpu.matmul %34, %33, %cst_29 {dimension_numbers = #tpu.dot_dimension_numbers<[1], [0], [0], [1], [0, 0, 1, 1], [], []>} : vector<56x4xf32>, vector<4x32xf32>, vector<56x32xf32> -> vector<56x32xf32>
    %36 = vector.extract_strided_slice %35 {offsets = [0, 0], sizes = [28, 32], strides = [1, 1]} : vector<56x32xf32> to vector<28x32xf32>
    %37 = arith.subf %13, %36 : vector<28x32xf32>
    %38 = vector.extract_strided_slice %35 {offsets = [28, 0], sizes = [28, 32], strides = [1, 1]} : vector<56x32xf32> to vector<28x32xf32>
    %39 = arith.mulf %37, %38 : vector<28x32xf32>
    %c0_30 = arith.constant 0 : index
    %c0_31 = arith.constant 0 : index
    %40 = vector.load %arg9[%c0_30, %c0_31] : memref<1x32xf32, #tpu.memory_space<vmem>>, vector<1x32xf32>
    %41 = vector.broadcast %40 : vector<1x32xf32> to vector<28x32xf32>
    %42 = arith.mulf %39, %41 : vector<28x32xf32>
    %c0_32 = arith.constant 0 : index
    %c0_33 = arith.constant 0 : index
    %43 = vector.load %arg10[%c0_32, %c0_33] : memref<1x32xf32, #tpu.memory_space<vmem>>, vector<1x32xf32>
    %44 = vector.broadcast %43 : vector<1x32xf32> to vector<28x32xf32>
    %45 = arith.addf %42, %44 : vector<28x32xf32>
    %46 = arith.negf %45 : vector<28x32xf32>
    %47 = math.exp %46 : vector<28x32xf32>
    %cst_34 = arith.constant 1.000000e+00 : f32
    %48 = vector.broadcast %cst_34 : f32 to vector<28x32xf32>
    %49 = arith.addf %48, %47 : vector<28x32xf32>
    %50 = arith.divf %48, %49 : vector<28x32xf32>
    %51 = arith.mulf %45, %50 : vector<28x32xf32>
    %c0_35 = arith.constant 0 : index
    %c0_36 = arith.constant 0 : index
    %c0_37 = arith.constant 0 : index
    %52 = vector.load %arg11[%c0_35, %c0_36, %c0_37] : memref<3x32x64xf32, #tpu.memory_space<vmem>>, vector<1x32x64xf32>
    %53 = vector.shape_cast %52 : vector<1x32x64xf32> to vector<32x64xf32>
    %cst_38 = arith.constant dense<0.000000e+00> : vector<28x64xf32>
    %54 = tpu.matmul %51, %53, %cst_38 {dimension_numbers = #tpu.dot_dimension_numbers<[1], [0], [0], [1], [0, 0, 1, 1], [], []>} : vector<28x32xf32>, vector<32x64xf32>, vector<28x64xf32> -> vector<28x64xf32>
    %c1_39 = arith.constant 1 : index
    %c0_40 = arith.constant 0 : index
    %c0_41 = arith.constant 0 : index
    %55 = vector.load %arg11[%c1_39, %c0_40, %c0_41] : memref<3x32x64xf32, #tpu.memory_space<vmem>>, vector<1x32x64xf32>
    %56 = vector.shape_cast %55 : vector<1x32x64xf32> to vector<32x64xf32>
    %cst_42 = arith.constant dense<0.000000e+00> : vector<28x64xf32>
    %57 = tpu.matmul %51, %56, %cst_42 {dimension_numbers = #tpu.dot_dimension_numbers<[1], [0], [0], [1], [0, 0, 1, 1], [], []>} : vector<28x32xf32>, vector<32x64xf32>, vector<28x64xf32> -> vector<28x64xf32>
    %c2_43 = arith.constant 2 : index
    %c0_44 = arith.constant 0 : index
    %c0_45 = arith.constant 0 : index
    %58 = vector.load %arg11[%c2_43, %c0_44, %c0_45] : memref<3x32x64xf32, #tpu.memory_space<vmem>>, vector<1x32x64xf32>
    %59 = vector.shape_cast %58 : vector<1x32x64xf32> to vector<32x64xf32>
    %cst_46 = arith.constant dense<0.000000e+00> : vector<28x64xf32>
    %60 = tpu.matmul %51, %59, %cst_46 {dimension_numbers = #tpu.dot_dimension_numbers<[1], [0], [0], [1], [0, 0, 1, 1], [], []>} : vector<28x32xf32>, vector<32x64xf32>, vector<28x64xf32> -> vector<28x64xf32>
    %61 = tpu.concatenate %54, %57, %60 in 0 : vector<28x64xf32>, vector<28x64xf32>, vector<28x64xf32> -> vector<84x64xf32>
    %c0_47 = arith.constant 0 : index
    %c0_48 = arith.constant 0 : index
    %62 = vector.load %arg12[%c0_47, %c0_48] : memref<12x84xf32, #tpu.memory_space<vmem>>, vector<12x84xf32>
    %cst_49 = arith.constant dense<0.000000e+00> : vector<12x64xf32>
    %63 = tpu.matmul %62, %61, %cst_49 {dimension_numbers = #tpu.dot_dimension_numbers<[1], [0], [0], [1], [0, 0, 1, 1], [], []>} : vector<12x84xf32>, vector<84x64xf32>, vector<12x64xf32> -> vector<12x64xf32>
    %64 = arith.mulf %63, %63 : vector<12x64xf32>
    %65 = tpu.concatenate %63, %64 in 0 : vector<12x64xf32>, vector<12x64xf32> -> vector<24x64xf32>
    %c0_50 = arith.constant 0 : index
    %c0_51 = arith.constant 0 : index
    %66 = vector.load %arg13[%c0_50, %c0_51] : memref<4x24xf32, #tpu.memory_space<vmem>>, vector<4x24xf32>
    %cst_52 = arith.constant dense<0.000000e+00> : vector<4x64xf32>
    %67 = tpu.matmul %66, %65, %cst_52 {dimension_numbers = #tpu.dot_dimension_numbers<[1], [0], [0], [1], [0, 0, 1, 1], [], []>} : vector<4x24xf32>, vector<24x64xf32>, vector<4x64xf32> -> vector<4x64xf32>
    %c0_53 = arith.constant 0 : index
    %c0_54 = arith.constant 0 : index
    %68 = vector.load %arg15[%c0_53, %c0_54] : memref<64x32xf32, #tpu.memory_space<vmem>>, vector<64x32xf32>
    %cst_55 = arith.constant dense<0.000000e+00> : vector<4x32xf32>
    %69 = tpu.matmul %67, %68, %cst_55 {dimension_numbers = #tpu.dot_dimension_numbers<[1], [0], [0], [1], [0, 0, 1, 1], [], []>} : vector<4x64xf32>, vector<64x32xf32>, vector<4x32xf32> -> vector<4x32xf32>
    %cst_56 = arith.constant 0.0833333358 : f32
    %70 = vector.broadcast %cst_56 : f32 to vector<4x32xf32>
    %71 = arith.mulf %69, %70 : vector<4x32xf32>
    %72 = vector.extract_strided_slice %71 {offsets = [0, 0], sizes = [2, 32], strides = [1, 1]} : vector<4x32xf32> to vector<2x32xf32>
    %73 = vector.extract_strided_slice %71 {offsets = [2, 0], sizes = [2, 32], strides = [1, 1]} : vector<4x32xf32> to vector<2x32xf32>
    %74 = arith.mulf %72, %72 : vector<2x32xf32>
    %75 = arith.subf %73, %74 : vector<2x32xf32>
    %cst_57 = arith.constant 0.000000e+00 : f32
    %76 = vector.broadcast %cst_57 : f32 to vector<2x32xf32>
    %77 = arith.maximumf %75, %76 : vector<2x32xf32>
    %cst_58 = arith.constant 9.99999974E-6 : f32
    %78 = vector.broadcast %cst_58 : f32 to vector<2x32xf32>
    %79 = arith.addf %77, %78 : vector<2x32xf32>
    %80 = math.rsqrt %79 : vector<2x32xf32>
    %81 = tpu.concatenate %72, %80 in 0 : vector<2x32xf32>, vector<2x32xf32> -> vector<4x32xf32>
    %c0_59 = arith.constant 0 : index
    %c0_60 = arith.constant 0 : index
    %82 = vector.load %arg16[%c0_59, %c0_60] : memref<32x64xf32, #tpu.memory_space<vmem>>, vector<32x64xf32>
    %cst_61 = arith.constant dense<0.000000e+00> : vector<4x64xf32>
    %83 = tpu.matmul %81, %82, %cst_61 {dimension_numbers = #tpu.dot_dimension_numbers<[1], [0], [0], [1], [0, 0, 1, 1], [], []>} : vector<4x32xf32>, vector<32x64xf32>, vector<4x64xf32> -> vector<4x64xf32>
    %c0_62 = arith.constant 0 : index
    %c0_63 = arith.constant 0 : index
    %84 = vector.load %arg14[%c0_62, %c0_63] : memref<24x4xf32, #tpu.memory_space<vmem>>, vector<24x4xf32>
    %cst_64 = arith.constant dense<0.000000e+00> : vector<24x64xf32>
    %85 = tpu.matmul %84, %83, %cst_64 {dimension_numbers = #tpu.dot_dimension_numbers<[1], [0], [0], [1], [0, 0, 1, 1], [], []>} : vector<24x4xf32>, vector<4x64xf32>, vector<24x64xf32> -> vector<24x64xf32>
    %86 = vector.extract_strided_slice %85 {offsets = [0, 0], sizes = [12, 64], strides = [1, 1]} : vector<24x64xf32> to vector<12x64xf32>
    %87 = arith.subf %63, %86 : vector<12x64xf32>
    %88 = vector.extract_strided_slice %85 {offsets = [12, 0], sizes = [12, 64], strides = [1, 1]} : vector<24x64xf32> to vector<12x64xf32>
    %89 = arith.mulf %87, %88 : vector<12x64xf32>
    %c0_65 = arith.constant 0 : index
    %c0_66 = arith.constant 0 : index
    %90 = vector.load %arg17[%c0_65, %c0_66] : memref<1x64xf32, #tpu.memory_space<vmem>>, vector<1x64xf32>
    %91 = vector.broadcast %90 : vector<1x64xf32> to vector<12x64xf32>
    %92 = arith.mulf %89, %91 : vector<12x64xf32>
    %c0_67 = arith.constant 0 : index
    %c0_68 = arith.constant 0 : index
    %93 = vector.load %arg18[%c0_67, %c0_68] : memref<1x64xf32, #tpu.memory_space<vmem>>, vector<1x64xf32>
    %94 = vector.broadcast %93 : vector<1x64xf32> to vector<12x64xf32>
    %95 = arith.addf %92, %94 : vector<12x64xf32>
    %96 = arith.negf %95 : vector<12x64xf32>
    %97 = math.exp %96 : vector<12x64xf32>
    %cst_69 = arith.constant 1.000000e+00 : f32
    %98 = vector.broadcast %cst_69 : f32 to vector<12x64xf32>
    %99 = arith.addf %98, %97 : vector<12x64xf32>
    %100 = arith.divf %98, %99 : vector<12x64xf32>
    %101 = arith.mulf %95, %100 : vector<12x64xf32>
    %c0_70 = arith.constant 0 : index
    %c0_71 = arith.constant 0 : index
    %c0_72 = arith.constant 0 : index
    %102 = vector.load %arg19[%c0_70, %c0_71, %c0_72] : memref<3x64x128xf32, #tpu.memory_space<vmem>>, vector<1x64x128xf32>
    %103 = vector.shape_cast %102 : vector<1x64x128xf32> to vector<64x128xf32>
    %cst_73 = arith.constant dense<0.000000e+00> : vector<12x128xf32>
    %104 = tpu.matmul %101, %103, %cst_73 {dimension_numbers = #tpu.dot_dimension_numbers<[1], [0], [0], [1], [0, 0, 1, 1], [], []>} : vector<12x64xf32>, vector<64x128xf32>, vector<12x128xf32> -> vector<12x128xf32>
    %c1_74 = arith.constant 1 : index
    %c0_75 = arith.constant 0 : index
    %c0_76 = arith.constant 0 : index
    %105 = vector.load %arg19[%c1_74, %c0_75, %c0_76] : memref<3x64x128xf32, #tpu.memory_space<vmem>>, vector<1x64x128xf32>
    %106 = vector.shape_cast %105 : vector<1x64x128xf32> to vector<64x128xf32>
    %cst_77 = arith.constant dense<0.000000e+00> : vector<12x128xf32>
    %107 = tpu.matmul %101, %106, %cst_77 {dimension_numbers = #tpu.dot_dimension_numbers<[1], [0], [0], [1], [0, 0, 1, 1], [], []>} : vector<12x64xf32>, vector<64x128xf32>, vector<12x128xf32> -> vector<12x128xf32>
    %c2_78 = arith.constant 2 : index
    %c0_79 = arith.constant 0 : index
    %c0_80 = arith.constant 0 : index
    %108 = vector.load %arg19[%c2_78, %c0_79, %c0_80] : memref<3x64x128xf32, #tpu.memory_space<vmem>>, vector<1x64x128xf32>
    %109 = vector.shape_cast %108 : vector<1x64x128xf32> to vector<64x128xf32>
    %cst_81 = arith.constant dense<0.000000e+00> : vector<12x128xf32>
    %110 = tpu.matmul %101, %109, %cst_81 {dimension_numbers = #tpu.dot_dimension_numbers<[1], [0], [0], [1], [0, 0, 1, 1], [], []>} : vector<12x64xf32>, vector<64x128xf32>, vector<12x128xf32> -> vector<12x128xf32>
    %111 = tpu.concatenate %104, %107, %110 in 0 : vector<12x128xf32>, vector<12x128xf32>, vector<12x128xf32> -> vector<36x128xf32>
    %c0_82 = arith.constant 0 : index
    %c0_83 = arith.constant 0 : index
    %112 = vector.load %arg20[%c0_82, %c0_83] : memref<4x36xf32, #tpu.memory_space<vmem>>, vector<4x36xf32>
    %cst_84 = arith.constant dense<0.000000e+00> : vector<4x128xf32>
    %113 = tpu.matmul %112, %111, %cst_84 {dimension_numbers = #tpu.dot_dimension_numbers<[1], [0], [0], [1], [0, 0, 1, 1], [], []>} : vector<4x36xf32>, vector<36x128xf32>, vector<4x128xf32> -> vector<4x128xf32>
    %114 = arith.mulf %113, %113 : vector<4x128xf32>
    %115 = tpu.concatenate %113, %114 in 0 : vector<4x128xf32>, vector<4x128xf32> -> vector<8x128xf32>
    %c0_85 = arith.constant 0 : index
    %c0_86 = arith.constant 0 : index
    %116 = vector.load %arg21[%c0_85, %c0_86] : memref<4x8xf32, #tpu.memory_space<vmem>>, vector<4x8xf32>
    %cst_87 = arith.constant dense<0.000000e+00> : vector<4x128xf32>
    %117 = tpu.matmul %116, %115, %cst_87 {dimension_numbers = #tpu.dot_dimension_numbers<[1], [0], [0], [1], [0, 0, 1, 1], [], []>} : vector<4x8xf32>, vector<8x128xf32>, vector<4x128xf32> -> vector<4x128xf32>
    %c0_88 = arith.constant 0 : index
    %c0_89 = arith.constant 0 : index
    %118 = vector.load %arg23[%c0_88, %c0_89] : memref<128x32xf32, #tpu.memory_space<vmem>>, vector<128x32xf32>
    %cst_90 = arith.constant dense<0.000000e+00> : vector<4x32xf32>
    %119 = tpu.matmul %117, %118, %cst_90 {dimension_numbers = #tpu.dot_dimension_numbers<[1], [0], [0], [1], [0, 0, 1, 1], [], []>} : vector<4x128xf32>, vector<128x32xf32>, vector<4x32xf32> -> vector<4x32xf32>
    %cst_91 = arith.constant 1.250000e-01 : f32
    %120 = vector.broadcast %cst_91 : f32 to vector<4x32xf32>
    %121 = arith.mulf %119, %120 : vector<4x32xf32>
    %122 = vector.extract_strided_slice %121 {offsets = [0, 0], sizes = [2, 32], strides = [1, 1]} : vector<4x32xf32> to vector<2x32xf32>
    %123 = vector.extract_strided_slice %121 {offsets = [2, 0], sizes = [2, 32], strides = [1, 1]} : vector<4x32xf32> to vector<2x32xf32>
    %124 = arith.mulf %122, %122 : vector<2x32xf32>
    %125 = arith.subf %123, %124 : vector<2x32xf32>
    %cst_92 = arith.constant 0.000000e+00 : f32
    %126 = vector.broadcast %cst_92 : f32 to vector<2x32xf32>
    %127 = arith.maximumf %125, %126 : vector<2x32xf32>
    %cst_93 = arith.constant 9.99999974E-6 : f32
    %128 = vector.broadcast %cst_93 : f32 to vector<2x32xf32>
    %129 = arith.addf %127, %128 : vector<2x32xf32>
    %130 = math.rsqrt %129 : vector<2x32xf32>
    %131 = tpu.concatenate %122, %130 in 0 : vector<2x32xf32>, vector<2x32xf32> -> vector<4x32xf32>
    %c0_94 = arith.constant 0 : index
    %c0_95 = arith.constant 0 : index
    %132 = vector.load %arg24[%c0_94, %c0_95] : memref<32x128xf32, #tpu.memory_space<vmem>>, vector<32x128xf32>
    %cst_96 = arith.constant dense<0.000000e+00> : vector<4x128xf32>
    %133 = tpu.matmul %131, %132, %cst_96 {dimension_numbers = #tpu.dot_dimension_numbers<[1], [0], [0], [1], [0, 0, 1, 1], [], []>} : vector<4x32xf32>, vector<32x128xf32>, vector<4x128xf32> -> vector<4x128xf32>
    %c0_97 = arith.constant 0 : index
    %c0_98 = arith.constant 0 : index
    %134 = vector.load %arg22[%c0_97, %c0_98] : memref<8x4xf32, #tpu.memory_space<vmem>>, vector<8x4xf32>
    %cst_99 = arith.constant dense<0.000000e+00> : vector<8x128xf32>
    %135 = tpu.matmul %134, %133, %cst_99 {dimension_numbers = #tpu.dot_dimension_numbers<[1], [0], [0], [1], [0, 0, 1, 1], [], []>} : vector<8x4xf32>, vector<4x128xf32>, vector<8x128xf32> -> vector<8x128xf32>
    %136 = vector.extract_strided_slice %135 {offsets = [0, 0], sizes = [4, 128], strides = [1, 1]} : vector<8x128xf32> to vector<4x128xf32>
    %137 = arith.subf %113, %136 : vector<4x128xf32>
    %138 = vector.extract_strided_slice %135 {offsets = [4, 0], sizes = [4, 128], strides = [1, 1]} : vector<8x128xf32> to vector<4x128xf32>
    %139 = arith.mulf %137, %138 : vector<4x128xf32>
    %c0_100 = arith.constant 0 : index
    %c0_101 = arith.constant 0 : index
    %140 = vector.load %arg25[%c0_100, %c0_101] : memref<1x128xf32, #tpu.memory_space<vmem>>, vector<1x128xf32>
    %141 = vector.broadcast %140 : vector<1x128xf32> to vector<4x128xf32>
    %142 = arith.mulf %139, %141 : vector<4x128xf32>
    %c0_102 = arith.constant 0 : index
    %c0_103 = arith.constant 0 : index
    %143 = vector.load %arg26[%c0_102, %c0_103] : memref<1x128xf32, #tpu.memory_space<vmem>>, vector<1x128xf32>
    %144 = vector.broadcast %143 : vector<1x128xf32> to vector<4x128xf32>
    %145 = arith.addf %142, %144 : vector<4x128xf32>
    %146 = arith.negf %145 : vector<4x128xf32>
    %147 = math.exp %146 : vector<4x128xf32>
    %cst_104 = arith.constant 1.000000e+00 : f32
    %148 = vector.broadcast %cst_104 : f32 to vector<4x128xf32>
    %149 = arith.addf %148, %147 : vector<4x128xf32>
    %150 = arith.divf %148, %149 : vector<4x128xf32>
    %151 = arith.mulf %145, %150 : vector<4x128xf32>
    %c0_105 = arith.constant 0 : index
    %c0_106 = arith.constant 0 : index
    %152 = vector.load %arg28[%c0_105, %c0_106] : memref<8x64xf32, #tpu.memory_space<vmem>>, vector<8x64xf32>
    %cst_107 = arith.constant dense<0.000000e+00> : vector<2x64xf32>
    %153 = tpu.matmul %1, %152, %cst_107 {dimension_numbers = #tpu.dot_dimension_numbers<[1], [0], [0], [1], [0, 0, 1, 1], [], []>} : vector<2x8xf32>, vector<8x64xf32>, vector<2x64xf32> -> vector<2x64xf32>
    %c0_108 = arith.constant 0 : index
    %c0_109 = arith.constant 0 : index
    %154 = vector.load %arg29[%c0_108, %c0_109] : memref<1x64xf32, #tpu.memory_space<vmem>>, vector<1x64xf32>
    %155 = vector.broadcast %154 : vector<1x64xf32> to vector<2x64xf32>
    %156 = arith.addf %153, %155 : vector<2x64xf32>
    %cst_110 = arith.constant 0.000000e+00 : f32
    %157 = vector.broadcast %cst_110 : f32 to vector<2x64xf32>
    %158 = arith.maximumf %156, %157 : vector<2x64xf32>
    %c0_111 = arith.constant 0 : index
    %c0_112 = arith.constant 0 : index
    %159 = vector.load %arg30[%c0_111, %c0_112] : memref<64x32xf32, #tpu.memory_space<vmem>>, vector<64x32xf32>
    %cst_113 = arith.constant dense<0.000000e+00> : vector<2x32xf32>
    %160 = tpu.matmul %158, %159, %cst_113 {dimension_numbers = #tpu.dot_dimension_numbers<[1], [0], [0], [1], [0, 0, 1, 1], [], []>} : vector<2x64xf32>, vector<64x32xf32>, vector<2x32xf32> -> vector<2x32xf32>
    %c0_114 = arith.constant 0 : index
    %c0_115 = arith.constant 0 : index
    %161 = vector.load %arg31[%c0_114, %c0_115] : memref<1x32xf32, #tpu.memory_space<vmem>>, vector<1x32xf32>
    %162 = vector.broadcast %161 : vector<1x32xf32> to vector<2x32xf32>
    %163 = arith.addf %160, %162 : vector<2x32xf32>
    %c0_116 = arith.constant 0 : index
    %c0_117 = arith.constant 0 : index
    %c0_118 = arith.constant 0 : index
    %164 = vector.load %arg27[%c0_116, %c0_117, %c0_118] : memref<2x2x4xf32, #tpu.memory_space<vmem>>, vector<1x2x4xf32>
    %165 = vector.shape_cast %164 : vector<1x2x4xf32> to vector<2x4xf32>
    %cst_119 = arith.constant dense<0.000000e+00> : vector<2x128xf32>
    %166 = tpu.matmul %165, %151, %cst_119 {dimension_numbers = #tpu.dot_dimension_numbers<[1], [0], [0], [1], [0, 0, 1, 1], [], []>} : vector<2x4xf32>, vector<4x128xf32>, vector<2x128xf32> -> vector<2x128xf32>
    %c1_120 = arith.constant 1 : index
    %c0_121 = arith.constant 0 : index
    %c0_122 = arith.constant 0 : index
    %167 = vector.load %arg27[%c1_120, %c0_121, %c0_122] : memref<2x2x4xf32, #tpu.memory_space<vmem>>, vector<1x2x4xf32>
    %168 = vector.shape_cast %167 : vector<1x2x4xf32> to vector<2x4xf32>
    %cst_123 = arith.constant dense<0.000000e+00> : vector<2x128xf32>
    %169 = tpu.matmul %168, %151, %cst_123 {dimension_numbers = #tpu.dot_dimension_numbers<[1], [0], [0], [1], [0, 0, 1, 1], [], []>} : vector<2x4xf32>, vector<4x128xf32>, vector<2x128xf32> -> vector<2x128xf32>
    %170 = tpu.concatenate %166, %169, %163 in 1 : vector<2x128xf32>, vector<2x128xf32>, vector<2x32xf32> -> vector<2x288xf32>
    %c0_124 = arith.constant 0 : index
    %c0_125 = arith.constant 0 : index
    %171 = vector.load %arg32[%c0_124, %c0_125] : memref<288x32xf32, #tpu.memory_space<vmem>>, vector<288x32xf32>
    %cst_126 = arith.constant dense<0.000000e+00> : vector<2x32xf32>
    %172 = tpu.matmul %170, %171, %cst_126 {dimension_numbers = #tpu.dot_dimension_numbers<[1], [0], [0], [1], [0, 0, 1, 1], [], []>} : vector<2x288xf32>, vector<288x32xf32>, vector<2x32xf32> -> vector<2x32xf32>
    %c0_127 = arith.constant 0 : index
    %c0_128 = arith.constant 0 : index
    %173 = vector.load %arg33[%c0_127, %c0_128] : memref<1x32xf32, #tpu.memory_space<vmem>>, vector<1x32xf32>
    %174 = vector.broadcast %173 : vector<1x32xf32> to vector<2x32xf32>
    %175 = arith.addf %172, %174 : vector<2x32xf32>
    %c0_129 = arith.constant 0 : index
    %c0_130 = arith.constant 0 : index
    %176 = vector.load %arg34[%c0_129, %c0_130] : memref<2x32xf32, #tpu.memory_space<vmem>>, vector<2x32xf32>
    tpu.vector_store %arg34[%c0_129, %c0_130], %175 {strides = array<i32>} : memref<2x32xf32, #tpu.memory_space<vmem>>, vector<2x32xf32>,
    return
  }
  func.func @transform_0(%arg0: i32) -> (i32, i32) {
    %c0_i32 = arith.constant 0 : i32
    %c0_i32_0 = arith.constant 0 : i32
    return %arg0, %c0_i32 : i32, i32
  }
  func.func @transform_1(%arg0: i32) -> (i32, i32) {
    %c0_i32 = arith.constant 0 : i32
    %c0_i32_0 = arith.constant 0 : i32
    return %arg0, %c0_i32 : i32, i32
  }
  func.func @transform_2(%arg0: i32) -> (i32, i32, i32) {
    %c0_i32 = arith.constant 0 : i32
    %c0_i32_0 = arith.constant 0 : i32
    %c0_i32_1 = arith.constant 0 : i32
    %c0_i32_2 = arith.constant 0 : i32
    return %c0_i32, %c0_i32_0, %c0_i32_1 : i32, i32, i32
  }
  func.func @transform_3(%arg0: i32) -> (i32, i32) {
    %c0_i32 = arith.constant 0 : i32
    %c0_i32_0 = arith.constant 0 : i32
    %c0_i32_1 = arith.constant 0 : i32
    return %c0_i32, %c0_i32_0 : i32, i32
  }
  func.func @transform_4(%arg0: i32) -> (i32, i32) {
    %c0_i32 = arith.constant 0 : i32
    %c0_i32_0 = arith.constant 0 : i32
    %c0_i32_1 = arith.constant 0 : i32
    return %c0_i32, %c0_i32_0 : i32, i32
  }
  func.func @transform_5(%arg0: i32) -> (i32, i32) {
    %c0_i32 = arith.constant 0 : i32
    %c0_i32_0 = arith.constant 0 : i32
    %c0_i32_1 = arith.constant 0 : i32
    return %c0_i32, %c0_i32_0 : i32, i32
  }
  func.func @transform_6(%arg0: i32) -> (i32, i32) {
    %c0_i32 = arith.constant 0 : i32
    %c0_i32_0 = arith.constant 0 : i32
    %c0_i32_1 = arith.constant 0 : i32
    return %c0_i32, %c0_i32_0 : i32, i32
  }
  func.func @transform_7(%arg0: i32) -> (i32, i32) {
    %c0_i32 = arith.constant 0 : i32
    %c0_i32_0 = arith.constant 0 : i32
    %c0_i32_1 = arith.constant 0 : i32
    return %c0_i32, %c0_i32_0 : i32, i32
  }
  func.func @transform_8(%arg0: i32) -> (i32, i32) {
    %c0_i32 = arith.constant 0 : i32
    %c0_i32_0 = arith.constant 0 : i32
    %c0_i32_1 = arith.constant 0 : i32
    return %c0_i32, %c0_i32_0 : i32, i32
  }
  func.func @transform_9(%arg0: i32) -> (i32, i32) {
    %c0_i32 = arith.constant 0 : i32
    %c0_i32_0 = arith.constant 0 : i32
    %c0_i32_1 = arith.constant 0 : i32
    return %c0_i32, %c0_i32_0 : i32, i32
  }
  func.func @transform_10(%arg0: i32) -> (i32, i32, i32) {
    %c0_i32 = arith.constant 0 : i32
    %c0_i32_0 = arith.constant 0 : i32
    %c0_i32_1 = arith.constant 0 : i32
    %c0_i32_2 = arith.constant 0 : i32
    return %c0_i32, %c0_i32_0, %c0_i32_1 : i32, i32, i32
  }
  func.func @transform_11(%arg0: i32) -> (i32, i32) {
    %c0_i32 = arith.constant 0 : i32
    %c0_i32_0 = arith.constant 0 : i32
    %c0_i32_1 = arith.constant 0 : i32
    return %c0_i32, %c0_i32_0 : i32, i32
  }
  func.func @transform_12(%arg0: i32) -> (i32, i32) {
    %c0_i32 = arith.constant 0 : i32
    %c0_i32_0 = arith.constant 0 : i32
    %c0_i32_1 = arith.constant 0 : i32
    return %c0_i32, %c0_i32_0 : i32, i32
  }
  func.func @transform_13(%arg0: i32) -> (i32, i32) {
    %c0_i32 = arith.constant 0 : i32
    %c0_i32_0 = arith.constant 0 : i32
    %c0_i32_1 = arith.constant 0 : i32
    return %c0_i32, %c0_i32_0 : i32, i32
  }
  func.func @transform_14(%arg0: i32) -> (i32, i32) {
    %c0_i32 = arith.constant 0 : i32
    %c0_i32_0 = arith.constant 0 : i32
    %c0_i32_1 = arith.constant 0 : i32
    return %c0_i32, %c0_i32_0 : i32, i32
  }
  func.func @transform_15(%arg0: i32) -> (i32, i32) {
    %c0_i32 = arith.constant 0 : i32
    %c0_i32_0 = arith.constant 0 : i32
    %c0_i32_1 = arith.constant 0 : i32
    return %c0_i32, %c0_i32_0 : i32, i32
  }
  func.func @transform_16(%arg0: i32) -> (i32, i32) {
    %c0_i32 = arith.constant 0 : i32
    %c0_i32_0 = arith.constant 0 : i32
    %c0_i32_1 = arith.constant 0 : i32
    return %c0_i32, %c0_i32_0 : i32, i32
  }
  func.func @transform_17(%arg0: i32) -> (i32, i32) {
    %c0_i32 = arith.constant 0 : i32
    %c0_i32_0 = arith.constant 0 : i32
    %c0_i32_1 = arith.constant 0 : i32
    return %c0_i32, %c0_i32_0 : i32, i32
  }
  func.func @transform_18(%arg0: i32) -> (i32, i32, i32) {
    %c0_i32 = arith.constant 0 : i32
    %c0_i32_0 = arith.constant 0 : i32
    %c0_i32_1 = arith.constant 0 : i32
    %c0_i32_2 = arith.constant 0 : i32
    return %c0_i32, %c0_i32_0, %c0_i32_1 : i32, i32, i32
  }
  func.func @transform_19(%arg0: i32) -> (i32, i32) {
    %c0_i32 = arith.constant 0 : i32
    %c0_i32_0 = arith.constant 0 : i32
    %c0_i32_1 = arith.constant 0 : i32
    return %c0_i32, %c0_i32_0 : i32, i32
  }
  func.func @transform_20(%arg0: i32) -> (i32, i32) {
    %c0_i32 = arith.constant 0 : i32
    %c0_i32_0 = arith.constant 0 : i32
    %c0_i32_1 = arith.constant 0 : i32
    return %c0_i32, %c0_i32_0 : i32, i32
  }
  func.func @transform_21(%arg0: i32) -> (i32, i32) {
    %c0_i32 = arith.constant 0 : i32
    %c0_i32_0 = arith.constant 0 : i32
    %c0_i32_1 = arith.constant 0 : i32
    return %c0_i32, %c0_i32_0 : i32, i32
  }
  func.func @transform_22(%arg0: i32) -> (i32, i32) {
    %c0_i32 = arith.constant 0 : i32
    %c0_i32_0 = arith.constant 0 : i32
    %c0_i32_1 = arith.constant 0 : i32
    return %c0_i32, %c0_i32_0 : i32, i32
  }
  func.func @transform_23(%arg0: i32) -> (i32, i32) {
    %c0_i32 = arith.constant 0 : i32
    %c0_i32_0 = arith.constant 0 : i32
    %c0_i32_1 = arith.constant 0 : i32
    return %c0_i32, %c0_i32_0 : i32, i32
  }
  func.func @transform_24(%arg0: i32) -> (i32, i32) {
    %c0_i32 = arith.constant 0 : i32
    %c0_i32_0 = arith.constant 0 : i32
    %c0_i32_1 = arith.constant 0 : i32
    return %c0_i32, %c0_i32_0 : i32, i32
  }
  func.func @transform_25(%arg0: i32) -> (i32, i32) {
    %c0_i32 = arith.constant 0 : i32
    %c0_i32_0 = arith.constant 0 : i32
    %c0_i32_1 = arith.constant 0 : i32
    return %c0_i32, %c0_i32_0 : i32, i32
  }
  func.func @transform_26(%arg0: i32) -> (i32, i32, i32) {
    %c0_i32 = arith.constant 0 : i32
    %c0_i32_0 = arith.constant 0 : i32
    %c0_i32_1 = arith.constant 0 : i32
    %c0_i32_2 = arith.constant 0 : i32
    return %c0_i32, %c0_i32_0, %c0_i32_1 : i32, i32, i32
  }
  func.func @transform_27(%arg0: i32) -> (i32, i32) {
    %c0_i32 = arith.constant 0 : i32
    %c0_i32_0 = arith.constant 0 : i32
    %c0_i32_1 = arith.constant 0 : i32
    return %c0_i32, %c0_i32_0 : i32, i32
  }
  func.func @transform_28(%arg0: i32) -> (i32, i32) {
    %c0_i32 = arith.constant 0 : i32
    %c0_i32_0 = arith.constant 0 : i32
    %c0_i32_1 = arith.constant 0 : i32
    return %c0_i32, %c0_i32_0 : i32, i32
  }
  func.func @transform_29(%arg0: i32) -> (i32, i32) {
    %c0_i32 = arith.constant 0 : i32
    %c0_i32_0 = arith.constant 0 : i32
    %c0_i32_1 = arith.constant 0 : i32
    return %c0_i32, %c0_i32_0 : i32, i32
  }
  func.func @transform_30(%arg0: i32) -> (i32, i32) {
    %c0_i32 = arith.constant 0 : i32
    %c0_i32_0 = arith.constant 0 : i32
    %c0_i32_1 = arith.constant 0 : i32
    return %c0_i32, %c0_i32_0 : i32, i32
  }
  func.func @transform_31(%arg0: i32) -> (i32, i32) {
    %c0_i32 = arith.constant 0 : i32
    %c0_i32_0 = arith.constant 0 : i32
    %c0_i32_1 = arith.constant 0 : i32
    return %c0_i32, %c0_i32_0 : i32, i32
  }
  func.func @transform_32(%arg0: i32) -> (i32, i32) {
    %c0_i32 = arith.constant 0 : i32
    %c0_i32_0 = arith.constant 0 : i32
    %c0_i32_1 = arith.constant 0 : i32
    return %c0_i32, %c0_i32_0 : i32, i32
  }
  func.func @transform_33(%arg0: i32) -> (i32, i32) {
    %c0_i32 = arith.constant 0 : i32
    %c0_i32_0 = arith.constant 0 : i32
    return %arg0, %c0_i32 : i32, i32
  }
}

</mosaic_0001>

<llo_original>
// kernel: tpu_custom_call.1
$region0: #{tpu_custom_call.1}
  #allocation0 [shape = 'u32[]', space=smem, size = 0x4, offset = 0x4, fixed_abs, tag = 'smem constant byte address 0x4 - core index']
  #allocation1 [shape = 'u32[72,128]{1,0:T(1,128)}', space=vmem, size = 0x9000, scoped, tag = 'internal scratch']
  %s0 = inlined_call_operand.smem [shape: u32[34], index: -1, kind: input, shape index: {}]
  %s1 = sld [smem:[%s0]]
  %s2 = scalar_lea.smem %s0, 1
  %s3 = sld [smem:[%s2]]
  %s4 = scalar_lea.smem %s0, 2
  %s5 = sld [smem:[%s4]]
  %s6 = scalar_lea.smem %s0, 3
  %s7 = sld [smem:[%s6]]
  %s8 = scalar_lea.smem %s0, 4
  %s9 = sld [smem:[%s8]]
  %s10 = scalar_lea.smem %s0, 5
  %s11 = sld [smem:[%s10]]
  %s12 = scalar_lea.smem %s0, 6
  %s13 = sld [smem:[%s12]]
  %s14 = scalar_lea.smem %s0, 7
  %s15 = sld [smem:[%s14]]
  %s16 = scalar_lea.smem %s0, 8
  %s17 = sld [smem:[%s16]]
  %s18 = scalar_lea.smem %s0, 9
  %s19 = sld [smem:[%s18]]
  %s20 = scalar_lea.smem %s0, 10
  %s21 = sld [smem:[%s20]]
  %s22 = scalar_lea.smem %s0, 11
  %s23 = sld [smem:[%s22]]
  %s24 = scalar_lea.smem %s0, 12
  %s25 = sld [smem:[%s24]]
  %s26 = scalar_lea.smem %s0, 13
  %s27 = sld [smem:[%s26]]
  %s28 = scalar_lea.smem %s0, 14
  %s29 = sld [smem:[%s28]]
  %s30 = scalar_lea.smem %s0, 15
  %s31 = sld [smem:[%s30]]
  %s32 = scalar_lea.smem %s0, 16
  %s33 = sld [smem:[%s32]]
  %s34 = scalar_lea.smem %s0, 17
  %s35 = sld [smem:[%s34]]
  %s36 = scalar_lea.smem %s0, 18
  %s37 = sld [smem:[%s36]]
  %s38 = scalar_lea.smem %s0, 19
  %s39 = sld [smem:[%s38]]
  %s40 = scalar_lea.smem %s0, 20
  %s41 = sld [smem:[%s40]]
  %s42 = scalar_lea.smem %s0, 21
  %s43 = sld [smem:[%s42]]
  %s44 = scalar_lea.smem %s0, 22
  %s45 = sld [smem:[%s44]]
  %s46 = scalar_lea.smem %s0, 23
  %s47 = sld [smem:[%s46]]
  %s48 = scalar_lea.smem %s0, 24
  %s49 = sld [smem:[%s48]]
  %s50 = scalar_lea.smem %s0, 25
  %s51 = sld [smem:[%s50]]
  %s52 = scalar_lea.smem %s0, 26
  %s53 = sld [smem:[%s52]]
  %s54 = scalar_lea.smem %s0, 27
  %s55 = sld [smem:[%s54]]
  %s56 = scalar_lea.smem %s0, 28
  %s57 = sld [smem:[%s56]]
  %s58 = scalar_lea.smem %s0, 29
  %s59 = sld [smem:[%s58]]
  %s60 = scalar_lea.smem %s0, 30
  %s61 = sld [smem:[%s60]]
  %s62 = scalar_lea.smem %s0, 31
  %s63 = sld [smem:[%s62]]
  %s64 = scalar_lea.smem %s0, 32
  %s65 = sld [smem:[%s64]]
  %s66 = scalar_lea.smem %s0, 33
  %s67 = sld [smem:[%s66]]
  %s68 = sld [smem:[#allocation0]]
  $region142: #{tpu_custom_call.1} parent=0
    _
  %s70 = ssub.s32 1, %s68
  %s71 = scalar_select 0, %s70, %s68
  $region1: #{tpu_custom_call.1} parent=0
    #allocation2 [shape = 'u8[1024]{0}', space=vmem, size = 0x400, scoped, tag = 'output window, operand 0, single buffered']
    #allocation3 [shape = 's32[1]{0}', space=sflag, size = 0x4, scoped, tag = 'scoped memory for tpu_custom_call.1']
    %72 = vsyncpa [#allocation3], 0
    // Predicated region
    $region2: #{tpu_custom_call.1} parent=1 // pred_check
      _
    $region3: #{tpu_custom_call.1} parent=1 // pred_check_branch
      %74 = sbr.rel (0) target = $region5
    $region4: #{tpu_custom_call.1} parent=1 // pred_region
      _
    $region5: #{tpu_custom_call.1} parent=1 // pred_fallthru
      _
    // Predicated region
    $region6: #{tpu_custom_call.1} parent=1 // pred_check
      _
    $region7: #{tpu_custom_call.1} parent=1 // pred_check_branch
      %76 = sbr.rel (0) target = $region9
    $region8: #{tpu_custom_call.1} parent=1 // pred_region
      _
    $region9: #{tpu_custom_call.1} parent=1 // pred_fallthru
      _
    // Predicated region
    $region10: #{tpu_custom_call.1} parent=1 // pred_check
      _
    $region11: #{tpu_custom_call.1} parent=1 // pred_check_branch
      %78 = sbr.rel (0) target = $region13
    $region12: #{tpu_custom_call.1} parent=1 // pred_region
      _
    $region13: #{tpu_custom_call.1} parent=1 // pred_fallthru
      _
    // Predicated region
    $region14: #{tpu_custom_call.1} parent=1 // pred_check
      _
    $region15: #{tpu_custom_call.1} parent=1 // pred_check_branch
      %80 = sbr.rel (0) target = $region17
    $region16: #{tpu_custom_call.1} parent=1 // pred_region
      _
    $region17: #{tpu_custom_call.1} parent=1 // pred_fallthru
      _
    // Predicated region
    $region18: #{tpu_custom_call.1} parent=1 // pred_check
      _
    $region19: #{tpu_custom_call.1} parent=1 // pred_check_branch
      %82 = sbr.rel (0) target = $region21
    $region20: #{tpu_custom_call.1} parent=1 // pred_region
      _
    $region21: #{tpu_custom_call.1} parent=1 // pred_fallthru
      _
    // Predicated region
    $region22: #{tpu_custom_call.1} parent=1 // pred_check
      _
    $region23: #{tpu_custom_call.1} parent=1 // pred_check_branch
      %84 = sbr.rel (0) target = $region25
    $region24: #{tpu_custom_call.1} parent=1 // pred_region
      _
    $region25: #{tpu_custom_call.1} parent=1 // pred_fallthru
      _
    // Predicated region
    $region26: #{tpu_custom_call.1} parent=1 // pred_check
      _
    $region27: #{tpu_custom_call.1} parent=1 // pred_check_branch
      %86 = sbr.rel (0) target = $region29
    $region28: #{tpu_custom_call.1} parent=1 // pred_region
      _
    $region29: #{tpu_custom_call.1} parent=1 // pred_fallthru
      _
    // Predicated region
    $region30: #{tpu_custom_call.1} parent=1 // pred_check
      _
    $region31: #{tpu_custom_call.1} parent=1 // pred_check_branch
      %88 = sbr.rel (0) target = $region33
    $region32: #{tpu_custom_call.1} parent=1 // pred_region
      _
    $region33: #{tpu_custom_call.1} parent=1 // pred_fallthru
      _
    // Predicated region
    $region34: #{tpu_custom_call.1} parent=1 // pred_check
      _
    $region35: #{tpu_custom_call.1} parent=1 // pred_check_branch
      %90 = sbr.rel (0) target = $region37
    $region36: #{tpu_custom_call.1} parent=1 // pred_region
      _
    $region37: #{tpu_custom_call.1} parent=1 // pred_fallthru
      _
    // Predicated region
    $region38: #{tpu_custom_call.1} parent=1 // pred_check
      _
    $region39: #{tpu_custom_call.1} parent=1 // pred_check_branch
      %92 = sbr.rel (0) target = $region41
    $region40: #{tpu_custom_call.1} parent=1 // pred_region
      _
    $region41: #{tpu_custom_call.1} parent=1 // pred_fallthru
      _
    // Predicated region
    $region42: #{tpu_custom_call.1} parent=1 // pred_check
      _
    $region43: #{tpu_custom_call.1} parent=1 // pred_check_branch
      %94 = sbr.rel (0) target = $region45
    $region44: #{tpu_custom_call.1} parent=1 // pred_region
      _
    $region45: #{tpu_custom_call.1} parent=1 // pred_fallthru
      _
    // Predicated region
    $region46: #{tpu_custom_call.1} parent=1 // pred_check
      _
    $region47: #{tpu_custom_call.1} parent=1 // pred_check_branch
      %96 = sbr.rel (0) target = $region49
    $region48: #{tpu_custom_call.1} parent=1 // pred_region
      _
    $region49: #{tpu_custom_call.1} parent=1 // pred_fallthru
      _
    // Predicated region
    $region50: #{tpu_custom_call.1} parent=1 // pred_check
      _
    $region51: #{tpu_custom_call.1} parent=1 // pred_check_branch
      %98 = sbr.rel (0) target = $region53
    $region52: #{tpu_custom_call.1} parent=1 // pred_region
      _
    $region53: #{tpu_custom_call.1} parent=1 // pred_fallthru
      _
    // Predicated region
    $region54: #{tpu_custom_call.1} parent=1 // pred_check
      _
    $region55: #{tpu_custom_call.1} parent=1 // pred_check_branch
      %100 = sbr.rel (0) target = $region57
    $region56: #{tpu_custom_call.1} parent=1 // pred_region
      _
    $region57: #{tpu_custom_call.1} parent=1 // pred_fallthru
      _
    // Predicated region
    $region58: #{tpu_custom_call.1} parent=1 // pred_check
      _
    $region59: #{tpu_custom_call.1} parent=1 // pred_check_branch
      %102 = sbr.rel (0) target = $region61
    $region60: #{tpu_custom_call.1} parent=1 // pred_region
      _
    $region61: #{tpu_custom_call.1} parent=1 // pred_fallthru
      _
    // Predicated region
    $region62: #{tpu_custom_call.1} parent=1 // pred_check
      _
    $region63: #{tpu_custom_call.1} parent=1 // pred_check_branch
      %104 = sbr.rel (0) target = $region65
    $region64: #{tpu_custom_call.1} parent=1 // pred_region
      _
    $region65: #{tpu_custom_call.1} parent=1 // pred_fallthru
      _
    // Predicated region
    $region66: #{tpu_custom_call.1} parent=1 // pred_check
      _
    $region67: #{tpu_custom_call.1} parent=1 // pred_check_branch
      %106 = sbr.rel (0) target = $region69
    $region68: #{tpu_custom_call.1} parent=1 // pred_region
      _
    $region69: #{tpu_custom_call.1} parent=1 // pred_fallthru
      _
    // Predicated region
    $region70: #{tpu_custom_call.1} parent=1 // pred_check
      _
    $region71: #{tpu_custom_call.1} parent=1 // pred_check_branch
      %108 = sbr.rel (0) target = $region73
    $region72: #{tpu_custom_call.1} parent=1 // pred_region
      _
    $region73: #{tpu_custom_call.1} parent=1 // pred_fallthru
      _
    // Predicated region
    $region74: #{tpu_custom_call.1} parent=1 // pred_check
      _
    $region75: #{tpu_custom_call.1} parent=1 // pred_check_branch
      %110 = sbr.rel (0) target = $region77
    $region76: #{tpu_custom_call.1} parent=1 // pred_region
      _
    $region77: #{tpu_custom_call.1} parent=1 // pred_fallthru
      _
    // Predicated region
    $region78: #{tpu_custom_call.1} parent=1 // pred_check
      _
    $region79: #{tpu_custom_call.1} parent=1 // pred_check_branch
      %112 = sbr.rel (0) target = $region81
    $region80: #{tpu_custom_call.1} parent=1 // pred_region
      _
    $region81: #{tpu_custom_call.1} parent=1 // pred_fallthru
      _
    // Predicated region
    $region82: #{tpu_custom_call.1} parent=1 // pred_check
      _
    $region83: #{tpu_custom_call.1} parent=1 // pred_check_branch
      %114 = sbr.rel (0) target = $region85
    $region84: #{tpu_custom_call.1} parent=1 // pred_region
      _
    $region85: #{tpu_custom_call.1} parent=1 // pred_fallthru
      _
    // Predicated region
    $region86: #{tpu_custom_call.1} parent=1 // pred_check
      _
    $region87: #{tpu_custom_call.1} parent=1 // pred_check_branch
      %116 = sbr.rel (0) target = $region89
    $region88: #{tpu_custom_call.1} parent=1 // pred_region
      _
    $region89: #{tpu_custom_call.1} parent=1 // pred_fallthru
      _
    // Predicated region
    $region90: #{tpu_custom_call.1} parent=1 // pred_check
      _
    $region91: #{tpu_custom_call.1} parent=1 // pred_check_branch
      %118 = sbr.rel (0) target = $region93
    $region92: #{tpu_custom_call.1} parent=1 // pred_region
      _
    $region93: #{tpu_custom_call.1} parent=1 // pred_fallthru
      _
    // Predicated region
    $region94: #{tpu_custom_call.1} parent=1 // pred_check
      _
    $region95: #{tpu_custom_call.1} parent=1 // pred_check_branch
      %120 = sbr.rel (0) target = $region97
    $region96: #{tpu_custom_call.1} parent=1 // pred_region
      _
    $region97: #{tpu_custom_call.1} parent=1 // pred_fallthru
      _
    // Predicated region
    $region98: #{tpu_custom_call.1} parent=1 // pred_check
      _
    $region99: #{tpu_custom_call.1} parent=1 // pred_check_branch
      %122 = sbr.rel (0) target = $region101
    $region100: #{tpu_custom_call.1} parent=1 // pred_region
      _
    $region101: #{tpu_custom_call.1} parent=1 // pred_fallthru
      _
    // Predicated region
    $region102: #{tpu_custom_call.1} parent=1 // pred_check
      _
    $region103: #{tpu_custom_call.1} parent=1 // pred_check_branch
      %124 = sbr.rel (0) target = $region105
    $region104: #{tpu_custom_call.1} parent=1 // pred_region
      _
    $region105: #{tpu_custom_call.1} parent=1 // pred_fallthru
      _
    // Predicated region
    $region106: #{tpu_custom_call.1} parent=1 // pred_check
      _
    $region107: #{tpu_custom_call.1} parent=1 // pred_check_branch
      %126 = sbr.rel (0) target = $region109
    $region108: #{tpu_custom_call.1} parent=1 // pred_region
      _
    $region109: #{tpu_custom_call.1} parent=1 // pred_fallthru
      _
    // Predicated region
    $region110: #{tpu_custom_call.1} parent=1 // pred_check
      _
    $region111: #{tpu_custom_call.1} parent=1 // pred_check_branch
      %128 = sbr.rel (0) target = $region113
    $region112: #{tpu_custom_call.1} parent=1 // pred_region
      _
    $region113: #{tpu_custom_call.1} parent=1 // pred_fallthru
      _
    // Predicated region
    $region114: #{tpu_custom_call.1} parent=1 // pred_check
      _
    $region115: #{tpu_custom_call.1} parent=1 // pred_check_branch
      %130 = sbr.rel (0) target = $region117
    $region116: #{tpu_custom_call.1} parent=1 // pred_region
      _
    $region117: #{tpu_custom_call.1} parent=1 // pred_fallthru
      _
    // Predicated region
    $region118: #{tpu_custom_call.1} parent=1 // pred_check
      _
    $region119: #{tpu_custom_call.1} parent=1 // pred_check_branch
      %132 = sbr.rel (0) target = $region121
    $region120: #{tpu_custom_call.1} parent=1 // pred_region
      _
    $region121: #{tpu_custom_call.1} parent=1 // pred_fallthru
      _
    // Predicated region
    $region122: #{tpu_custom_call.1} parent=1 // pred_check
      _
    $region123: #{tpu_custom_call.1} parent=1 // pred_check_branch
      %134 = sbr.rel (0) target = $region125
    $region124: #{tpu_custom_call.1} parent=1 // pred_region
      _
    $region125: #{tpu_custom_call.1} parent=1 // pred_fallthru
      _
    // Predicated region
    $region126: #{tpu_custom_call.1} parent=1 // pred_check
      _
    $region127: #{tpu_custom_call.1} parent=1 // pred_check_branch
      %136 = sbr.rel (0) target = $region129
    $region128: #{tpu_custom_call.1} parent=1 // pred_region
      _
    $region129: #{tpu_custom_call.1} parent=1 // pred_fallthru
      _
    // Predicated region
    $region130: #{tpu_custom_call.1} parent=1 // pred_check
      _
    $region131: #{tpu_custom_call.1} parent=1 // pred_check_branch
      %138 = sbr.rel (0) target = $region133
    $region132: #{tpu_custom_call.1} parent=1 // pred_region
      _
    $region133: #{tpu_custom_call.1} parent=1 // pred_fallthru
      _
    %v139 = vld [vmem:[%s3] sm:$0xff]
    %v140 = vld [vmem:[%s3 + $0x8] sm:$0xff]
    %v141 = vld [vmem:[%s3 + $0x10] sm:$0xff]
    %v142 = vld [vmem:[%s3 + $0x18] sm:$0xff]
    %v143 = vld [vmem:[%s1] sm:$0x3]
    %v144 = vld [vmem:[%s5] sm:$0xf]
    %vm145 = vcmask 31744
    %v147 = vsel %vm145, %v139, 0
    %v150 = vsel %vm145, %v140, 0
    %v153 = vsel %vm145, %v141, 0
    %v156 = vsel %vm145, %v142, 0
    %vm158 = vcmask 1043456
    %v160 = vsel %vm158, %v144, 0
    %162 = vmatpush.msra.mxu0 0.0
    %163 = vmatpush.msra.mxu0 0.0
    %164 = vmatpush.msra.mxu0 0.0
    %165 = vmatpush.msra.mxu0 0.0
    %166 = vmatpush.msra.mxu0 0.0
    %167 = vmatpush.msra.mxu0 0.0
    %168 = vmatpush.msra.mxu0 0.0
    %169 = vmatpush.msra.mxu0 0.0
    %170 = vmatpush.msra.mxu0 0.0
    %171 = vmatpush.msra.mxu0 0.0
    %172 = vmatpush.msra.mxu0 0.0
    %173 = vmatpush.msra.mxu0 0.0
    %174 = vmatpush.msra.mxu0 0.0
    %175 = vmatpush.msra.mxu0 0.0
    %176 = vmatpush.msra.mxu0 0.0
    %177 = vmatpush.msra.mxu0 %v160
    %178 = vmatmul.f32.gmra.mxu0 %v147
    %v179 = vpop.f32.mrf.mxu0
    %v180 = vadd.f32 0.0, %v179
    %181 = vmatmul.f32.gmra.mxu0 %v150
    %v182 = vpop.f32.mrf.mxu0
    %v183 = vadd.f32 0.0, %v182
    %184 = vmatmul.f32.gmra.mxu0 %v153
    %v185 = vpop.f32.mrf.mxu0
    %v186 = vadd.f32 0.0, %v185
    %187 = vmatmul.f32.gmra.mxu0 %v156
    %v188 = vpop.f32.mrf.mxu0
    %v189 = vadd.f32 0.0, %v188
    %190 = vdwg.mxu0
    %s191 = scalar_lea.vmem %s5, 4
    %v192 = vld [vmem:[%s191] sm:$0xf]
    %v194 = vsel %vm158, %v192, 0
    %196 = vmatpush.msra.mxu0 0.0
    %197 = vmatpush.msra.mxu0 0.0
    %198 = vmatpush.msra.mxu0 0.0
    %199 = vmatpush.msra.mxu0 0.0
    %200 = vmatpush.msra.mxu0 0.0
    %201 = vmatpush.msra.mxu0 0.0
    %202 = vmatpush.msra.mxu0 0.0
    %203 = vmatpush.msra.mxu0 0.0
    %204 = vmatpush.msra.mxu0 0.0
    %205 = vmatpush.msra.mxu0 0.0
    %206 = vmatpush.msra.mxu0 0.0
    %207 = vmatpush.msra.mxu0 0.0
    %208 = vmatpush.msra.mxu0 0.0
    %209 = vmatpush.msra.mxu0 0.0
    %210 = vmatpush.msra.mxu0 0.0
    %211 = vmatpush.msra.mxu0 %v194
    %212 = vmatmul.f32.gmra.mxu0 %v147
    %v213 = vpop.f32.mrf.mxu0
    %v214 = vadd.f32 0.0, %v213
    %215 = vmatmul.f32.gmra.mxu0 %v150
    %v216 = vpop.f32.mrf.mxu0
    %v217 = vadd.f32 0.0, %v216
    %218 = vmatmul.f32.gmra.mxu0 %v153
    %v219 = vpop.f32.mrf.mxu0
    %v220 = vadd.f32 0.0, %v219
    %221 = vmatmul.f32.gmra.mxu0 %v156
    %v222 = vpop.f32.mrf.mxu0
    %v223 = vadd.f32 0.0, %v222
    %224 = vdwg.mxu0
    %s225 = scalar_lea.vmem %s5, 8
    %v226 = vld [vmem:[%s225] sm:$0xf]
    %v228 = vsel %vm158, %v226, 0
    %230 = vmatpush.msra.mxu0 0.0
    %231 = vmatpush.msra.mxu0 0.0
    %232 = vmatpush.msra.mxu0 0.0
    %233 = vmatpush.msra.mxu0 0.0
    %234 = vmatpush.msra.mxu0 0.0
    %235 = vmatpush.msra.mxu0 0.0
    %236 = vmatpush.msra.mxu0 0.0
    %237 = vmatpush.msra.mxu0 0.0
    %238 = vmatpush.msra.mxu0 0.0
    %239 = vmatpush.msra.mxu0 0.0
    %240 = vmatpush.msra.mxu0 0.0
    %241 = vmatpush.msra.mxu0 0.0
    %242 = vmatpush.msra.mxu0 0.0
    %243 = vmatpush.msra.mxu0 0.0
    %244 = vmatpush.msra.mxu0 0.0
    %245 = vmatpush.msra.mxu0 %v228
    %246 = vmatmul.f32.gmra.mxu0 %v147
    %v247 = vpop.f32.mrf.mxu0
    %v248 = vadd.f32 0.0, %v247
    %249 = vmatmul.f32.gmra.mxu0 %v150
    %v250 = vpop.f32.mrf.mxu0
    %v251 = vadd.f32 0.0, %v250
    %252 = vmatmul.f32.gmra.mxu0 %v153
    %v253 = vpop.f32.mrf.mxu0
    %v254 = vadd.f32 0.0, %v253
    %255 = vmatmul.f32.gmra.mxu0 %v156
    %v256 = vpop.f32.mrf.mxu0
    %v257 = vadd.f32 0.0, %v256
    %258 = vdwg.mxu0
    %v259 = vld [vmem:[%s7] sm:$0xff]
    %v260 = vld [vmem:[%s7 + $0x8] sm:$0xff]
    %v261 = vld [vmem:[%s7 + $0x10] sm:$0xff]
    %v262 = vld [vmem:[%s7 + $0x18] sm:$0xf]
    %vm263 = vcmask 785408
    %v265 = vsel %vm263, %v259, 0
    %v268 = vsel %vm263, %v260, 0
    %v271 = vsel %vm263, %v261, 0
    %v274 = vsel %vm263, %v262, 0
    %276 = vmatpush.msra.mxu0 0.0
    %277 = vmatpush.msra.mxu0 0.0
    %278 = vmatpush.msra.mxu0 0.0
    %279 = vmatpush.msra.mxu0 0.0
    %280 = vmatpush.msra.mxu0 %v257
    %281 = vmatpush.msra.mxu0 %v254
    %282 = vmatpush.msra.mxu0 %v251
    %283 = vmatpush.msra.mxu0 %v248
    %284 = vmatpush.msra.mxu0 %v223
    %285 = vmatpush.msra.mxu0 %v220
    %286 = vmatpush.msra.mxu0 %v217
    %287 = vmatpush.msra.mxu0 %v214
    %288 = vmatpush.msra.mxu0 %v189
    %289 = vmatpush.msra.mxu0 %v186
    %290 = vmatpush.msra.mxu0 %v183
    %291 = vmatpush.msra.mxu0 %v180
    %292 = vmatmul.f32.gmra.mxu0 %v265
    %v293 = vpop.f32.mrf.mxu0
    %v294 = vadd.f32 0.0, %v293
    %295 = vmatmul.f32.gmra.mxu0 %v268
    %v296 = vpop.f32.mrf.mxu0
    %v297 = vadd.f32 0.0, %v296
    %298 = vmatmul.f32.gmra.mxu0 %v271
    %v299 = vpop.f32.mrf.mxu0
    %v300 = vadd.f32 0.0, %v299
    %301 = vmatmul.f32.gmra.mxu0 %v274
    %v302 = vpop.f32.mrf.mxu0
    %v303 = vadd.f32 0.0, %v302
    %304 = vdwg.mxu0
    %v305 = vmul.f32 %v294, %v294
    %v306 = vmul.f32 %v297, %v297
    %v307 = vmul.f32 %v300, %v300
    %v308 = vmul.f32 %v303, %v303
    %v313 = vrot.slane %v305, 4
    %v314 = vrot.slane %v306, 4
    %v315 = vsel %vm158, %v313, %v314
    %v316 = vrot.slane %v307, 4
    %v317 = vsel %vm158, %v314, %v316
    %v318 = vrot.slane %v308, 4
    %v319 = vsel %vm158, %v316, %v318
    %v324 = vsel %vm158, %v303, %v313
    %v325 = vld [vmem:[%s9] sm:$0xf]
    %vm326 = vcmask 457728
    %v328 = vsel %vm326, %v325, 0
    %330 = vmatpush.msra.mxu0 0.0
    %331 = vmatpush.msra.mxu0 0.0
    %332 = vmatpush.msra.mxu0 0.0
    %333 = vmatpush.msra.mxu0 0.0
    %334 = vmatpush.msra.mxu0 0.0
    %335 = vmatpush.msra.mxu0 0.0
    %336 = vmatpush.msra.mxu0 0.0
    %337 = vmatpush.msra.mxu0 0.0
    %338 = vmatpush.msra.mxu0 0.0
    %339 = vmatpush.msra.mxu0 %v319
    %340 = vmatpush.msra.mxu0 %v317
    %341 = vmatpush.msra.mxu0 %v315
    %342 = vmatpush.msra.mxu0 %v324
    %343 = vmatpush.msra.mxu0 %v300
    %344 = vmatpush.msra.mxu0 %v297
    %345 = vmatpush.msra.mxu0 %v294
    %346 = vmatmul.f32.gmra.mxu0 %v328
    %v347 = vpop.f32.mrf.mxu0
    %v348 = vadd.f32 0.0, %v347
    %349 = vdwg.mxu0
    %v350 = vld [vmem:[%s13] sm:$0xff]
    %v351 = vld [vmem:[%s13 + $0x8] sm:$0xff]
    %v352 = vld [vmem:[%s13 + $0x10] sm:$0xff]
    %v353 = vld [vmem:[%s13 + $0x18] sm:$0xff]
    %vm354 = vcmask 261120
    %v356 = vsel %vm354, %v348, 0
    %358 = vmatpush.msra.mxu0 0.0
    %359 = vmatpush.msra.mxu0 0.0
    %360 = vmatpush.msra.mxu0 0.0
    %361 = vmatpush.msra.mxu0 0.0
    %362 = vmatpush.msra.mxu0 0.0
    %363 = vmatpush.msra.mxu0 0.0
    %364 = vmatpush.msra.mxu0 0.0
    %365 = vmatpush.msra.mxu0 0.0
    %366 = vmatpush.msra.mxu0 0.0
    %367 = vmatpush.msra.mxu0 0.0
    %368 = vmatpush.msra.mxu0 0.0
    %369 = vmatpush.msra.mxu0 0.0
    %370 = vmatpush.msra.mxu0 %v353
    %371 = vmatpush.msra.mxu0 %v352
    %372 = vmatpush.msra.mxu0 %v351
    %373 = vmatpush.msra.mxu0 %v350
    %374 = vmatmul.f32.gmra.mxu0 %v356
    %v375 = vpop.f32.mrf.mxu0
    %v376 = vadd.f32 0.0, %v375
    %377 = vdwg.mxu0
    %v378 = vmul.f32 %v376, 0.008928572
    %v379 = vmul.f32 %v378, %v378
    %v381 = vrot.slane %v379, 6
    %v383 = vsub.f32 %v378, %v381
    %v384 = vmax.f32 %v383, 0.0
    %v385 = vadd.f32 %v384, 1e-05
    %v386 = vrsqrt.pop %v385
    %v387 = vmul.f32 %v386, %v385
    %v388 = vmul.f32 %v387, %v386
    %v389 = vmul.f32 0.5, %v388
    %v390 = vsub.f32 1.5, %v389
    %v391 = vmul.f32 %v386, %v390
    %vm392 = vweird.f32 %v385
    %vm393 = vweird.f32 %v386
    %vm394 = vmor %vm392, %vm393
    %v395 = vsel %vm394, %v386, %v391
    %vm396 = vcmask 1041408
    %v397 = vsel %vm396, %v378, %v395
    %v398 = vld [vmem:[%s15] sm:$0xf]
    %v400 = vsel %vm145, %v397, 0
    %v403 = vsel %vm158, %v398, 0
    %405 = vmatpush.msra.mxu0 0.0
    %406 = vmatpush.msra.mxu0 0.0
    %407 = vmatpush.msra.mxu0 0.0
    %408 = vmatpush.msra.mxu0 0.0
    %409 = vmatpush.msra.mxu0 0.0
    %410 = vmatpush.msra.mxu0 0.0
    %411 = vmatpush.msra.mxu0 0.0
    %412 = vmatpush.msra.mxu0 0.0
    %413 = vmatpush.msra.mxu0 0.0
    %414 = vmatpush.msra.mxu0 0.0
    %415 = vmatpush.msra.mxu0 0.0
    %416 = vmatpush.msra.mxu0 0.0
    %417 = vmatpush.msra.mxu0 0.0
    %418 = vmatpush.msra.mxu0 0.0
    %419 = vmatpush.msra.mxu0 0.0
    %420 = vmatpush.msra.mxu0 %v403
    %421 = vmatmul.f32.gmra.mxu0 %v400
    %v422 = vpop.f32.mrf.mxu0
    %v423 = vadd.f32 0.0, %v422
    %424 = vdwg.mxu0
    %v425 = vld [vmem:[%s11] sm:$0xff]
    %v426 = vld [vmem:[%s11 + $0x8] sm:$0xff]
    %v427 = vld [vmem:[%s11 + $0x10] sm:$0xff]
    %v428 = vld [vmem:[%s11 + $0x18] sm:$0xff]
    %v429 = vld [vmem:[%s11 + $0x20] sm:$0xff]
    %v430 = vld [vmem:[%s11 + $0x28] sm:$0xff]
    %v431 = vld [vmem:[%s11 + $0x30] sm:$0xff]
    %v433 = vsel %vm145, %v425, 0
    %v436 = vsel %vm145, %v426, 0
    %v439 = vsel %vm145, %v427, 0
    %v442 = vsel %vm145, %v428, 0
    %v445 = vsel %vm145, %v429, 0
    %v448 = vsel %vm145, %v430, 0
    %v451 = vsel %vm145, %v431, 0
    %v454 = vsel %vm158, %v423, 0
    %456 = vmatpush.msra.mxu0 0.0
    %457 = vmatpush.msra.mxu0 0.0
    %458 = vmatpush.msra.mxu0 0.0
    %459 = vmatpush.msra.mxu0 0.0
    %460 = vmatpush.msra.mxu0 0.0
    %461 = vmatpush.msra.mxu0 0.0
    %462 = vmatpush.msra.mxu0 0.0
    %463 = vmatpush.msra.mxu0 0.0
    %464 = vmatpush.msra.mxu0 0.0
    %465 = vmatpush.msra.mxu0 0.0
    %466 = vmatpush.msra.mxu0 0.0
    %467 = vmatpush.msra.mxu0 0.0
    %468 = vmatpush.msra.mxu0 0.0
    %469 = vmatpush.msra.mxu0 0.0
    %470 = vmatpush.msra.mxu0 0.0
    %471 = vmatpush.msra.mxu0 %v454
    %472 = vmatmul.f32.gmra.mxu0 %v433
    %v473 = vpop.f32.mrf.mxu0
    %v474 = vadd.f32 0.0, %v473
    %475 = vmatmul.f32.gmra.mxu0 %v436
    %v476 = vpop.f32.mrf.mxu0
    %v477 = vadd.f32 0.0, %v476
    %478 = vmatmul.f32.gmra.mxu0 %v439
    %v479 = vpop.f32.mrf.mxu0
    %v480 = vadd.f32 0.0, %v479
    %481 = vmatmul.f32.gmra.mxu0 %v442
    %v482 = vpop.f32.mrf.mxu0
    %v483 = vadd.f32 0.0, %v482
    %484 = vmatmul.f32.gmra.mxu0 %v445
    %v485 = vpop.f32.mrf.mxu0
    %v486 = vadd.f32 0.0, %v485
    %487 = vmatmul.f32.gmra.mxu0 %v448
    %v488 = vpop.f32.mrf.mxu0
    %v489 = vadd.f32 0.0, %v488
    %490 = vmatmul.f32.gmra.mxu0 %v451
    %v491 = vpop.f32.mrf.mxu0
    %v492 = vadd.f32 0.0, %v491
    %493 = vdwg.mxu0
    %v494 = vsub.f32 %v294, %v474
    %v495 = vsub.f32 %v297, %v477
    %v496 = vsub.f32 %v300, %v480
    %v497 = vsub.f32 %v303, %v483
    %v502 = vrot.slane %v483, 4
    %v503 = vrot.slane %v486, 4
    %v504 = vsel %vm158, %v502, %v503
    %v505 = vrot.slane %v489, 4
    %v506 = vsel %vm158, %v503, %v505
    %v507 = vrot.slane %v492, 4
    %v508 = vsel %vm158, %v505, %v507
    %v513 = vmul.f32 %v494, %v504
    %v514 = vmul.f32 %v495, %v506
    %v515 = vmul.f32 %v496, %v508
    %v516 = vmul.f32 %v497, %v507
    %v517 = vld [vmem:[%s17] sm:$0x1]
    %v519 = vperm.slane %v517, 0
    %v521 = vmul.f32 %v513, %v519
    %v522 = vmul.f32 %v514, %v519
    %v523 = vmul.f32 %v515, %v519
    %v524 = vmul.f32 %v516, %v519
    %v525 = vld [vmem:[%s19] sm:$0x1]
    %v527 = vperm.slane %v525, 0
    %v529 = vadd.f32 %v521, %v527
    %v530 = vadd.f32 %v522, %v527
    %v531 = vadd.f32 %v523, %v527
    %v532 = vadd.f32 %v524, %v527
    %v533 = vxor.u32 %v529, 2147483648
    %v534 = vxor.u32 %v530, 2147483648
    %v535 = vxor.u32 %v531, 2147483648
    %v536 = vxor.u32 %v532, 2147483648
    %v537 = vmul.f32 %v533, 1.442695
    %v538 = vpow.pop %v537
    %v539 = vmul.f32 %v534, 1.442695
    %v540 = vpow.pop %v539
    %v541 = vmul.f32 %v535, 1.442695
    %v542 = vpow.pop %v541
    %v543 = vmul.f32 %v536, 1.442695
    %v544 = vpow.pop %v543
    %v545 = vadd.f32 %v538, 1.0
    %v546 = vadd.f32 %v540, 1.0
    %v547 = vadd.f32 %v542, 1.0
    %v548 = vadd.f32 %v544, 1.0
    %v549 = vrcp.pop %v545
    %v550 = vmul.f32 %v545, %v549
    %v551 = vsub.f32 1.0, %v550
    %v552 = vmul.f32 %v549, %v551
    %v553 = vadd.f32 %v549, %v552
    %vm554 = vweird.f32 %v545
    %vm555 = vweird.f32 %v549
    %vm556 = vmor %vm554, %vm555
    %v557 = vsel %vm556, %v549, %v553
    %v558 = vand.u32 2147483647, %v545
    %vm559 = vcmp.eq.f32.partialorder %v558, 8.507059e+37
    %v560 = vand.u32 %v545, 2147483648
    %v561 = vor.u32 1.1754944e-38, %v560
    %v562 = vsel %vm559, %v561, %v557
    %v563 = vmul.f32 1.0, %v562
    %v564 = vrcp.pop %v546
    %v565 = vmul.f32 %v546, %v564
    %v566 = vsub.f32 1.0, %v565
    %v567 = vmul.f32 %v564, %v566
    %v568 = vadd.f32 %v564, %v567
    %vm569 = vweird.f32 %v546
    %vm570 = vweird.f32 %v564
    %vm571 = vmor %vm569, %vm570
    %v572 = vsel %vm571, %v564, %v568
    %v573 = vand.u32 2147483647, %v546
    %vm574 = vcmp.eq.f32.partialorder %v573, 8.507059e+37
    %v575 = vand.u32 %v546, 2147483648
    %v576 = vor.u32 1.1754944e-38, %v575
    %v577 = vsel %vm574, %v576, %v572
    %v578 = vmul.f32 1.0, %v577
    %v579 = vrcp.pop %v547
    %v580 = vmul.f32 %v547, %v579
    %v581 = vsub.f32 1.0, %v580
    %v582 = vmul.f32 %v579, %v581
    %v583 = vadd.f32 %v579, %v582
    %vm584 = vweird.f32 %v547
    %vm585 = vweird.f32 %v579
    %vm586 = vmor %vm584, %vm585
    %v587 = vsel %vm586, %v579, %v583
    %v588 = vand.u32 2147483647, %v547
    %vm589 = vcmp.eq.f32.partialorder %v588, 8.507059e+37
    %v590 = vand.u32 %v547, 2147483648
    %v591 = vor.u32 1.1754944e-38, %v590
    %v592 = vsel %vm589, %v591, %v587
    %v593 = vmul.f32 1.0, %v592
    %v594 = vrcp.pop %v548
    %v595 = vmul.f32 %v548, %v594
    %v596 = vsub.f32 1.0, %v595
    %v597 = vmul.f32 %v594, %v596
    %v598 = vadd.f32 %v594, %v597
    %vm599 = vweird.f32 %v548
    %vm600 = vweird.f32 %v594
    %vm601 = vmor %vm599, %vm600
    %v602 = vsel %vm601, %v594, %v598
    %v603 = vand.u32 2147483647, %v548
    %vm604 = vcmp.eq.f32.partialorder %v603, 8.507059e+37
    %v605 = vand.u32 %v548, 2147483648
    %v606 = vor.u32 1.1754944e-38, %v605
    %v607 = vsel %vm604, %v606, %v602
    %v608 = vmul.f32 1.0, %v607
    %v609 = vmul.f32 %v529, %v563
    %v610 = vmul.f32 %v530, %v578
    %v611 = vmul.f32 %v531, %v593
    %v612 = vmul.f32 %v532, %v608
    %v613 = vld [vmem:[%s21] sm:$0xff]
    %v614 = vld [vmem:[%s21 + $0x8] sm:$0xff]
    %v615 = vld [vmem:[%s21 + $0x10] sm:$0xff]
    %v616 = vld [vmem:[%s21 + $0x18] sm:$0xff]
    %v618 = vsel %vm354, %v609, 0
    %v621 = vsel %vm354, %v610, 0
    %v624 = vsel %vm354, %v611, 0
    %v627 = vsel %vm354, %v612, 0
    %629 = vmatpush.msra.mxu0 0.0
    %630 = vmatpush.msra.mxu0 0.0
    %631 = vmatpush.msra.mxu0 0.0
    %632 = vmatpush.msra.mxu0 0.0
    %633 = vmatpush.msra.mxu0 0.0
    %634 = vmatpush.msra.mxu0 0.0
    %635 = vmatpush.msra.mxu0 0.0
    %636 = vmatpush.msra.mxu0 0.0
    %637 = vmatpush.msra.mxu0 0.0
    %638 = vmatpush.msra.mxu0 0.0
    %639 = vmatpush.msra.mxu0 0.0
    %640 = vmatpush.msra.mxu0 0.0
    %641 = vmatpush.msra.mxu0 %v616
    %642 = vmatpush.msra.mxu0 %v615
    %643 = vmatpush.msra.mxu0 %v614
    %644 = vmatpush.msra.mxu0 %v613
    %645 = vmatmul.f32.gmra.mxu0 %v618
    %v646 = vpop.f32.mrf.mxu0
    %v647 = vadd.f32 0.0, %v646
    %648 = vmatmul.f32.gmra.mxu0 %v621
    %v649 = vpop.f32.mrf.mxu0
    %v650 = vadd.f32 0.0, %v649
    %651 = vmatmul.f32.gmra.mxu0 %v624
    %v652 = vpop.f32.mrf.mxu0
    %v653 = vadd.f32 0.0, %v652
    %654 = vmatmul.f32.gmra.mxu0 %v627
    %v655 = vpop.f32.mrf.mxu0
    %v656 = vadd.f32 0.0, %v655
    %657 = vdwg.mxu0
    %s658 = scalar_lea.vmem %s21, 32
    %v659 = vld [vmem:[%s658] sm:$0xff]
    %v660 = vld [vmem:[%s658 + $0x8] sm:$0xff]
    %v661 = vld [vmem:[%s658 + $0x10] sm:$0xff]
    %v662 = vld [vmem:[%s658 + $0x18] sm:$0xff]
    %663 = vmatpush.msra.mxu0 0.0
    %664 = vmatpush.msra.mxu0 0.0
    %665 = vmatpush.msra.mxu0 0.0
    %666 = vmatpush.msra.mxu0 0.0
    %667 = vmatpush.msra.mxu0 0.0
    %668 = vmatpush.msra.mxu0 0.0
    %669 = vmatpush.msra.mxu0 0.0
    %670 = vmatpush.msra.mxu0 0.0
    %671 = vmatpush.msra.mxu0 0.0
    %672 = vmatpush.msra.mxu0 0.0
    %673 = vmatpush.msra.mxu0 0.0
    %674 = vmatpush.msra.mxu0 0.0
    %675 = vmatpush.msra.mxu0 %v662
    %676 = vmatpush.msra.mxu0 %v661
    %677 = vmatpush.msra.mxu0 %v660
    %678 = vmatpush.msra.mxu0 %v659
    %679 = vmatmul.f32.gmra.mxu0 %v618
    %v680 = vpop.f32.mrf.mxu0
    %v681 = vadd.f32 0.0, %v680
    %682 = vmatmul.f32.gmra.mxu0 %v621
    %v683 = vpop.f32.mrf.mxu0
    %v684 = vadd.f32 0.0, %v683
    %685 = vmatmul.f32.gmra.mxu0 %v624
    %v686 = vpop.f32.mrf.mxu0
    %v687 = vadd.f32 0.0, %v686
    %688 = vmatmul.f32.gmra.mxu0 %v627
    %v689 = vpop.f32.mrf.mxu0
    %v690 = vadd.f32 0.0, %v689
    %691 = vdwg.mxu0
    %s692 = scalar_lea.vmem %s21, 64
    %v693 = vld [vmem:[%s692] sm:$0xff]
    %v694 = vld [vmem:[%s692 + $0x8] sm:$0xff]
    %v695 = vld [vmem:[%s692 + $0x10] sm:$0xff]
    %v696 = vld [vmem:[%s692 + $0x18] sm:$0xff]
    %697 = vmatpush.msra.mxu0 0.0
    %698 = vmatpush.msra.mxu0 0.0
    %699 = vmatpush.msra.mxu0 0.0
    %700 = vmatpush.msra.mxu0 0.0
    %701 = vmatpush.msra.mxu0 0.0
    %702 = vmatpush.msra.mxu0 0.0
    %703 = vmatpush.msra.mxu0 0.0
    %704 = vmatpush.msra.mxu0 0.0
    %705 = vmatpush.msra.mxu0 0.0
    %706 = vmatpush.msra.mxu0 0.0
    %707 = vmatpush.msra.mxu0 0.0
    %708 = vmatpush.msra.mxu0 0.0
    %709 = vmatpush.msra.mxu0 %v696
    %710 = vmatpush.msra.mxu0 %v695
    %711 = vmatpush.msra.mxu0 %v694
    %712 = vmatpush.msra.mxu0 %v693
    %713 = vmatmul.f32.gmra.mxu0 %v618
    %v714 = vpop.f32.mrf.mxu0
    %v715 = vadd.f32 0.0, %v714
    %716 = vmatmul.f32.gmra.mxu0 %v621
    %v717 = vpop.f32.mrf.mxu0
    %v718 = vadd.f32 0.0, %v717
    %719 = vmatmul.f32.gmra.mxu0 %v624
    %v720 = vpop.f32.mrf.mxu0
    %v721 = vadd.f32 0.0, %v720
    %722 = vmatmul.f32.gmra.mxu0 %v627
    %v723 = vpop.f32.mrf.mxu0
    %v724 = vadd.f32 0.0, %v723
    %725 = vdwg.mxu0
    %v730 = vrot.slane %v681, 4
    %v731 = vrot.slane %v684, 4
    %v732 = vsel %vm158, %v730, %v731
    %v733 = vrot.slane %v687, 4
    %v734 = vsel %vm158, %v731, %v733
    %v735 = vrot.slane %v690, 4
    %v736 = vsel %vm158, %v733, %v735
    %v741 = vsel %vm158, %v656, %v730
    %v742 = vld [vmem:[%s23] sm:$0xff]
    %v743 = vld [vmem:[%s23 + $0x8] sm:$0xf]
    %vm744 = vcmask 687104
    %v746 = vsel %vm744, %v742, 0
    %v749 = vsel %vm744, %v743, 0
    %v752 = vsel %vm158, %v724, 0
    %754 = vmatpush.msra.mxu0 0.0
    %755 = vmatpush.msra.mxu0 0.0
    %756 = vmatpush.msra.mxu0 0.0
    %757 = vmatpush.msra.mxu0 0.0
    %758 = vmatpush.msra.mxu0 0.0
    %759 = vmatpush.msra.mxu0 %v752
    %760 = vmatpush.msra.mxu0 %v721
    %761 = vmatpush.msra.mxu0 %v718
    %762 = vmatpush.msra.mxu0 %v715
    %763 = vmatpush.msra.mxu0 %v736
    %764 = vmatpush.msra.mxu0 %v734
    %765 = vmatpush.msra.mxu0 %v732
    %766 = vmatpush.msra.mxu0 %v741
    %767 = vmatpush.msra.mxu0 %v653
    %768 = vmatpush.msra.mxu0 %v650
    %769 = vmatpush.msra.mxu0 %v647
    %770 = vmatmul.f32.gmra.mxu0 %v746
    %v771 = vpop.f32.mrf.mxu0
    %v772 = vadd.f32 0.0, %v771
    %773 = vmatmul.f32.gmra.mxu0 %v749
    %v774 = vpop.f32.mrf.mxu0
    %v775 = vadd.f32 0.0, %v774
    %776 = vdwg.mxu0
    %v777 = vmul.f32 %v772, %v772
    %v778 = vmul.f32 %v775, %v775
    %v781 = vrot.slane %v777, 4
    %v782 = vrot.slane %v778, 4
    %v783 = vsel %vm158, %v781, %v782
    %v786 = vsel %vm158, %v775, %v781
    %v787 = vld [vmem:[%s25] sm:$0xf]
    %vm788 = vcmask 195584
    %v790 = vsel %vm788, %v787, 0
    %792 = vmatpush.msra.mxu0 0.0
    %793 = vmatpush.msra.mxu0 0.0
    %794 = vmatpush.msra.mxu0 0.0
    %795 = vmatpush.msra.mxu0 0.0
    %796 = vmatpush.msra.mxu0 0.0
    %797 = vmatpush.msra.mxu0 0.0
    %798 = vmatpush.msra.mxu0 0.0
    %799 = vmatpush.msra.mxu0 0.0
    %800 = vmatpush.msra.mxu0 0.0
    %801 = vmatpush.msra.mxu0 0.0
    %802 = vmatpush.msra.mxu0 0.0
    %803 = vmatpush.msra.mxu0 0.0
    %804 = vmatpush.msra.mxu0 0.0
    %805 = vmatpush.msra.mxu0 %v783
    %806 = vmatpush.msra.mxu0 %v786
    %807 = vmatpush.msra.mxu0 %v772
    %808 = vmatmul.f32.gmra.mxu0 %v790
    %v809 = vpop.f32.mrf.mxu0
    %v810 = vadd.f32 0.0, %v809
    %811 = vdwg.mxu0
    %v812 = vld [vmem:[%s29] sm:$0xff]
    %v813 = vld [vmem:[%s29 + $0x8] sm:$0xff]
    %v814 = vld [vmem:[%s29 + $0x10] sm:$0xff]
    %v815 = vld [vmem:[%s29 + $0x18] sm:$0xff]
    %v816 = vld [vmem:[%s29 + $0x20] sm:$0xff]
    %v817 = vld [vmem:[%s29 + $0x28] sm:$0xff]
    %v818 = vld [vmem:[%s29 + $0x30] sm:$0xff]
    %v819 = vld [vmem:[%s29 + $0x38] sm:$0xff]
    %vm820 = vcmask 523264
    %v822 = vsel %vm820, %v810, 0
    %824 = vmatpush.msra.mxu0 0.0
    %825 = vmatpush.msra.mxu0 0.0
    %826 = vmatpush.msra.mxu0 0.0
    %827 = vmatpush.msra.mxu0 0.0
    %828 = vmatpush.msra.mxu0 0.0
    %829 = vmatpush.msra.mxu0 0.0
    %830 = vmatpush.msra.mxu0 0.0
    %831 = vmatpush.msra.mxu0 0.0
    %832 = vmatpush.msra.mxu0 %v819
    %833 = vmatpush.msra.mxu0 %v818
    %834 = vmatpush.msra.mxu0 %v817
    %835 = vmatpush.msra.mxu0 %v816
    %836 = vmatpush.msra.mxu0 %v815
    %837 = vmatpush.msra.mxu0 %v814
    %838 = vmatpush.msra.mxu0 %v813
    %839 = vmatpush.msra.mxu0 %v812
    %840 = vmatmul.f32.gmra.mxu0 %v822
    %v841 = vpop.f32.mrf.mxu0
    %v842 = vadd.f32 0.0, %v841
    %843 = vdwg.mxu0
    %v844 = vmul.f32 %v842, 0.083333336
    %v845 = vmul.f32 %v844, %v844
    %v847 = vrot.slane %v845, 6
    %v849 = vsub.f32 %v844, %v847
    %v850 = vmax.f32 %v849, 0.0
    %v851 = vadd.f32 %v850, 1e-05
    %v852 = vrsqrt.pop %v851
    %v853 = vmul.f32 %v852, %v851
    %v854 = vmul.f32 %v853, %v852
    %v855 = vmul.f32 0.5, %v854
    %v856 = vsub.f32 1.5, %v855
    %v857 = vmul.f32 %v852, %v856
    %vm858 = vweird.f32 %v851
    %vm859 = vweird.f32 %v852
    %vm860 = vmor %vm858, %vm859
    %v861 = vsel %vm860, %v852, %v857
    %v862 = vsel %vm396, %v844, %v861
    %v863 = vld [vmem:[%s31] sm:$0xff]
    %v864 = vld [vmem:[%s31 + $0x8] sm:$0xff]
    %v865 = vld [vmem:[%s31 + $0x10] sm:$0xff]
    %v866 = vld [vmem:[%s31 + $0x18] sm:$0xff]
    %v868 = vsel %vm354, %v862, 0
    %870 = vmatpush.msra.mxu0 0.0
    %871 = vmatpush.msra.mxu0 0.0
    %872 = vmatpush.msra.mxu0 0.0
    %873 = vmatpush.msra.mxu0 0.0
    %874 = vmatpush.msra.mxu0 0.0
    %875 = vmatpush.msra.mxu0 0.0
    %876 = vmatpush.msra.mxu0 0.0
    %877 = vmatpush.msra.mxu0 0.0
    %878 = vmatpush.msra.mxu0 0.0
    %879 = vmatpush.msra.mxu0 0.0
    %880 = vmatpush.msra.mxu0 0.0
    %881 = vmatpush.msra.mxu0 0.0
    %882 = vmatpush.msra.mxu0 %v866
    %883 = vmatpush.msra.mxu0 %v865
    %884 = vmatpush.msra.mxu0 %v864
    %885 = vmatpush.msra.mxu0 %v863
    %886 = vmatmul.f32.gmra.mxu0 %v868
    %v887 = vpop.f32.mrf.mxu0
    %v888 = vadd.f32 0.0, %v887
    %889 = vdwg.mxu0
    %v890 = vld [vmem:[%s27] sm:$0xff]
    %v891 = vld [vmem:[%s27 + $0x8] sm:$0xff]
    %v892 = vld [vmem:[%s27 + $0x10] sm:$0xff]
    %v894 = vsel %vm145, %v890, 0
    %v897 = vsel %vm145, %v891, 0
    %v900 = vsel %vm145, %v892, 0
    %v903 = vsel %vm158, %v888, 0
    %905 = vmatpush.msra.mxu0 0.0
    %906 = vmatpush.msra.mxu0 0.0
    %907 = vmatpush.msra.mxu0 0.0
    %908 = vmatpush.msra.mxu0 0.0
    %909 = vmatpush.msra.mxu0 0.0
    %910 = vmatpush.msra.mxu0 0.0
    %911 = vmatpush.msra.mxu0 0.0
    %912 = vmatpush.msra.mxu0 0.0
    %913 = vmatpush.msra.mxu0 0.0
    %914 = vmatpush.msra.mxu0 0.0
    %915 = vmatpush.msra.mxu0 0.0
    %916 = vmatpush.msra.mxu0 0.0
    %917 = vmatpush.msra.mxu0 0.0
    %918 = vmatpush.msra.mxu0 0.0
    %919 = vmatpush.msra.mxu0 0.0
    %920 = vmatpush.msra.mxu0 %v903
    %921 = vmatmul.f32.gmra.mxu0 %v894
    %v922 = vpop.f32.mrf.mxu0
    %v923 = vadd.f32 0.0, %v922
    %924 = vmatmul.f32.gmra.mxu0 %v897
    %v925 = vpop.f32.mrf.mxu0
    %v926 = vadd.f32 0.0, %v925
    %927 = vmatmul.f32.gmra.mxu0 %v900
    %v928 = vpop.f32.mrf.mxu0
    %v929 = vadd.f32 0.0, %v928
    %930 = vdwg.mxu0
    %v931 = vsub.f32 %v772, %v923
    %v932 = vsub.f32 %v775, %v926
    %v935 = vrot.slane %v926, 4
    %v936 = vrot.slane %v929, 4
    %v937 = vsel %vm158, %v935, %v936
    %v940 = vmul.f32 %v931, %v937
    %v941 = vmul.f32 %v932, %v936
    %v942 = vld [vmem:[%s33] sm:$0x1]
    %v944 = vperm.slane %v942, 0
    %v946 = vmul.f32 %v940, %v944
    %v947 = vmul.f32 %v941, %v944
    %v948 = vld [vmem:[%s35] sm:$0x1]
    %v950 = vperm.slane %v948, 0
    %v952 = vadd.f32 %v946, %v950
    %v953 = vadd.f32 %v947, %v950
    %v954 = vxor.u32 %v952, 2147483648
    %v955 = vxor.u32 %v953, 2147483648
    %v956 = vmul.f32 %v954, 1.442695
    %v957 = vpow.pop %v956
    %v958 = vmul.f32 %v955, 1.442695
    %v959 = vpow.pop %v958
    %v960 = vadd.f32 %v957, 1.0
    %v961 = vadd.f32 %v959, 1.0
    %v962 = vrcp.pop %v960
    %v963 = vmul.f32 %v960, %v962
    %v964 = vsub.f32 1.0, %v963
    %v965 = vmul.f32 %v962, %v964
    %v966 = vadd.f32 %v962, %v965
    %vm967 = vweird.f32 %v960
    %vm968 = vweird.f32 %v962
    %vm969 = vmor %vm967, %vm968
    %v970 = vsel %vm969, %v962, %v966
    %v971 = vand.u32 2147483647, %v960
    %vm972 = vcmp.eq.f32.partialorder %v971, 8.507059e+37
    %v973 = vand.u32 %v960, 2147483648
    %v974 = vor.u32 1.1754944e-38, %v973
    %v975 = vsel %vm972, %v974, %v970
    %v976 = vmul.f32 1.0, %v975
    %v977 = vrcp.pop %v961
    %v978 = vmul.f32 %v961, %v977
    %v979 = vsub.f32 1.0, %v978
    %v980 = vmul.f32 %v977, %v979
    %v981 = vadd.f32 %v977, %v980
    %vm982 = vweird.f32 %v961
    %vm983 = vweird.f32 %v977
    %vm984 = vmor %vm982, %vm983
    %v985 = vsel %vm984, %v977, %v981
    %v986 = vand.u32 2147483647, %v961
    %vm987 = vcmp.eq.f32.partialorder %v986, 8.507059e+37
    %v988 = vand.u32 %v961, 2147483648
    %v989 = vor.u32 1.1754944e-38, %v988
    %v990 = vsel %vm987, %v989, %v985
    %v991 = vmul.f32 1.0, %v990
    %v992 = vmul.f32 %v952, %v976
    %v993 = vmul.f32 %v953, %v991
    %v994 = vld [vmem:[%s37] sm:$0xff]
    %v995 = vld [vmem:[%s37 + $0x8] sm:$0xff]
    %v996 = vld [vmem:[%s37 + $0x10] sm:$0xff]
    %v997 = vld [vmem:[%s37 + $0x18] sm:$0xff]
    %v998 = vld [vmem:[%s37 + $0x20] sm:$0xff]
    %v999 = vld [vmem:[%s37 + $0x28] sm:$0xff]
    %v1000 = vld [vmem:[%s37 + $0x30] sm:$0xff]
    %v1001 = vld [vmem:[%s37 + $0x38] sm:$0xff]
    %v1003 = vsel %vm820, %v992, 0
    %v1006 = vsel %vm820, %v993, 0
    %1008 = vmatpush.msra.mxu0 0.0
    %1009 = vmatpush.msra.mxu0 0.0
    %1010 = vmatpush.msra.mxu0 0.0
    %1011 = vmatpush.msra.mxu0 0.0
    %1012 = vmatpush.msra.mxu0 0.0
    %1013 = vmatpush.msra.mxu0 0.0
    %1014 = vmatpush.msra.mxu0 0.0
    %1015 = vmatpush.msra.mxu0 0.0
    %1016 = vmatpush.msra.mxu0 %v1001
    %1017 = vmatpush.msra.mxu0 %v1000
    %1018 = vmatpush.msra.mxu0 %v999
    %1019 = vmatpush.msra.mxu0 %v998
    %1020 = vmatpush.msra.mxu0 %v997
    %1021 = vmatpush.msra.mxu0 %v996
    %1022 = vmatpush.msra.mxu0 %v995
    %1023 = vmatpush.msra.mxu0 %v994
    %1024 = vmatmul.f32.gmra.mxu0 %v1003
    %v1025 = vpop.f32.mrf.mxu0
    %v1026 = vadd.f32 0.0, %v1025
    %1027 = vmatmul.f32.gmra.mxu0 %v1006
    %v1028 = vpop.f32.mrf.mxu0
    %v1029 = vadd.f32 0.0, %v1028
    %1030 = vdwg.mxu0
    %s1031 = scalar_lea.vmem %s37, 64
    %v1032 = vld [vmem:[%s1031] sm:$0xff]
    %v1033 = vld [vmem:[%s1031 + $0x8] sm:$0xff]
    %v1034 = vld [vmem:[%s1031 + $0x10] sm:$0xff]
    %v1035 = vld [vmem:[%s1031 + $0x18] sm:$0xff]
    %v1036 = vld [vmem:[%s1031 + $0x20] sm:$0xff]
    %v1037 = vld [vmem:[%s1031 + $0x28] sm:$0xff]
    %v1038 = vld [vmem:[%s1031 + $0x30] sm:$0xff]
    %v1039 = vld [vmem:[%s1031 + $0x38] sm:$0xff]
    %1040 = vmatpush.msra.mxu0 0.0
    %1041 = vmatpush.msra.mxu0 0.0
    %1042 = vmatpush.msra.mxu0 0.0
    %1043 = vmatpush.msra.mxu0 0.0
    %1044 = vmatpush.msra.mxu0 0.0
    %1045 = vmatpush.msra.mxu0 0.0
    %1046 = vmatpush.msra.mxu0 0.0
    %1047 = vmatpush.msra.mxu0 0.0
    %1048 = vmatpush.msra.mxu0 %v1039
    %1049 = vmatpush.msra.mxu0 %v1038
    %1050 = vmatpush.msra.mxu0 %v1037
    %1051 = vmatpush.msra.mxu0 %v1036
    %1052 = vmatpush.msra.mxu0 %v1035
    %1053 = vmatpush.msra.mxu0 %v1034
    %1054 = vmatpush.msra.mxu0 %v1033
    %1055 = vmatpush.msra.mxu0 %v1032
    %1056 = vmatmul.f32.gmra.mxu0 %v1003
    %v1057 = vpop.f32.mrf.mxu0
    %v1058 = vadd.f32 0.0, %v1057
    %1059 = vmatmul.f32.gmra.mxu0 %v1006
    %v1060 = vpop.f32.mrf.mxu0
    %v1061 = vadd.f32 0.0, %v1060
    %1062 = vdwg.mxu0
    %s1063 = scalar_lea.vmem %s37, 128
    %v1064 = vld [vmem:[%s1063] sm:$0xff]
    %v1065 = vld [vmem:[%s1063 + $0x8] sm:$0xff]
    %v1066 = vld [vmem:[%s1063 + $0x10] sm:$0xff]
    %v1067 = vld [vmem:[%s1063 + $0x18] sm:$0xff]
    %v1068 = vld [vmem:[%s1063 + $0x20] sm:$0xff]
    %v1069 = vld [vmem:[%s1063 + $0x28] sm:$0xff]
    %v1070 = vld [vmem:[%s1063 + $0x30] sm:$0xff]
    %v1071 = vld [vmem:[%s1063 + $0x38] sm:$0xff]
    %1072 = vmatpush.msra.mxu0 0.0
    %1073 = vmatpush.msra.mxu0 0.0
    %1074 = vmatpush.msra.mxu0 0.0
    %1075 = vmatpush.msra.mxu0 0.0
    %1076 = vmatpush.msra.mxu0 0.0
    %1077 = vmatpush.msra.mxu0 0.0
    %1078 = vmatpush.msra.mxu0 0.0
    %1079 = vmatpush.msra.mxu0 0.0
    %1080 = vmatpush.msra.mxu0 %v1071
    %1081 = vmatpush.msra.mxu0 %v1070
    %1082 = vmatpush.msra.mxu0 %v1069
    %1083 = vmatpush.msra.mxu0 %v1068
    %1084 = vmatpush.msra.mxu0 %v1067
    %1085 = vmatpush.msra.mxu0 %v1066
    %1086 = vmatpush.msra.mxu0 %v1065
    %1087 = vmatpush.msra.mxu0 %v1064
    %1088 = vmatmul.f32.gmra.mxu0 %v1003
    %v1089 = vpop.f32.mrf.mxu0
    %v1090 = vadd.f32 0.0, %v1089
    %1091 = vmatmul.f32.gmra.mxu0 %v1006
    %v1092 = vpop.f32.mrf.mxu0
    %v1093 = vadd.f32 0.0, %v1092
    %1094 = vdwg.mxu0
    %v1097 = vrot.slane %v1058, 4
    %v1098 = vrot.slane %v1061, 4
    %v1099 = vsel %vm158, %v1097, %v1098
    %v1102 = vsel %vm158, %v1029, %v1097
    %v1103 = vld [vmem:[%s39] sm:$0xf]
    %vm1104 = vcmask 293888
    %v1106 = vsel %vm1104, %v1103, 0
    %v1109 = vsel %vm158, %v1093, 0
    %1111 = vmatpush.msra.mxu0 0.0
    %1112 = vmatpush.msra.mxu0 0.0
    %1113 = vmatpush.msra.mxu0 0.0
    %1114 = vmatpush.msra.mxu0 0.0
    %1115 = vmatpush.msra.mxu0 0.0
    %1116 = vmatpush.msra.mxu0 0.0
    %1117 = vmatpush.msra.mxu0 0.0
    %1118 = vmatpush.msra.mxu0 0.0
    %1119 = vmatpush.msra.mxu0 0.0
    %1120 = vmatpush.msra.mxu0 0.0
    %1121 = vmatpush.msra.mxu0 0.0
    %1122 = vmatpush.msra.mxu0 %v1109
    %1123 = vmatpush.msra.mxu0 %v1090
    %1124 = vmatpush.msra.mxu0 %v1099
    %1125 = vmatpush.msra.mxu0 %v1102
    %1126 = vmatpush.msra.mxu0 %v1026
    %1127 = vmatmul.f32.gmra.mxu0 %v1106
    %v1128 = vpop.f32.mrf.mxu0
    %v1129 = vadd.f32 0.0, %v1128
    %1130 = vdwg.mxu0
    %v1131 = vmul.f32 %v1129, %v1129
    %v1133 = vrot.slane %v1131, 4
    %v1135 = vsel %vm158, %v1129, %v1133
    %v1136 = vld [vmem:[%s41] sm:$0xf]
    %vm1137 = vcmask 64512
    %v1139 = vsel %vm1137, %v1136, 0
    %1141 = vmatpush.msra.mxu0 0.0
    %1142 = vmatpush.msra.mxu0 0.0
    %1143 = vmatpush.msra.mxu0 0.0
    %1144 = vmatpush.msra.mxu0 0.0
    %1145 = vmatpush.msra.mxu0 0.0
    %1146 = vmatpush.msra.mxu0 0.0
    %1147 = vmatpush.msra.mxu0 0.0
    %1148 = vmatpush.msra.mxu0 0.0
    %1149 = vmatpush.msra.mxu0 0.0
    %1150 = vmatpush.msra.mxu0 0.0
    %1151 = vmatpush.msra.mxu0 0.0
    %1152 = vmatpush.msra.mxu0 0.0
    %1153 = vmatpush.msra.mxu0 0.0
    %1154 = vmatpush.msra.mxu0 0.0
    %1155 = vmatpush.msra.mxu0 0.0
    %1156 = vmatpush.msra.mxu0 %v1135
    %1157 = vmatmul.f32.gmra.mxu0 %v1139
    %v1158 = vpop.f32.mrf.mxu0
    %v1159 = vadd.f32 0.0, %v1158
    %1160 = vdwg.mxu0
    %v1161 = vld [vmem:[%s45] sm:$0xff]
    %v1162 = vld [vmem:[%s45 + $0x8] sm:$0xff]
    %v1163 = vld [vmem:[%s45 + $0x10] sm:$0xff]
    %v1164 = vld [vmem:[%s45 + $0x18] sm:$0xff]
    %v1165 = vld [vmem:[%s45 + $0x20] sm:$0xff]
    %v1166 = vld [vmem:[%s45 + $0x28] sm:$0xff]
    %v1167 = vld [vmem:[%s45 + $0x30] sm:$0xff]
    %v1168 = vld [vmem:[%s45 + $0x38] sm:$0xff]
    %v1169 = vld [vmem:[%s45 + $0x40] sm:$0xff]
    %v1170 = vld [vmem:[%s45 + $0x48] sm:$0xff]
    %v1171 = vld [vmem:[%s45 + $0x50] sm:$0xff]
    %v1172 = vld [vmem:[%s45 + $0x58] sm:$0xff]
    %v1173 = vld [vmem:[%s45 + $0x60] sm:$0xff]
    %v1174 = vld [vmem:[%s45 + $0x68] sm:$0xff]
    %v1175 = vld [vmem:[%s45 + $0x70] sm:$0xff]
    %v1176 = vld [vmem:[%s45 + $0x78] sm:$0xff]
    %1177 = vmatpush.msra.mxu0 %v1176
    %1178 = vmatpush.msra.mxu0 %v1175
    %1179 = vmatpush.msra.mxu0 %v1174
    %1180 = vmatpush.msra.mxu0 %v1173
    %1181 = vmatpush.msra.mxu0 %v1172
    %1182 = vmatpush.msra.mxu0 %v1171
    %1183 = vmatpush.msra.mxu0 %v1170
    %1184 = vmatpush.msra.mxu0 %v1169
    %1185 = vmatpush.msra.mxu0 %v1168
    %1186 = vmatpush.msra.mxu0 %v1167
    %1187 = vmatpush.msra.mxu0 %v1166
    %1188 = vmatpush.msra.mxu0 %v1165
    %1189 = vmatpush.msra.mxu0 %v1164
    %1190 = vmatpush.msra.mxu0 %v1163
    %1191 = vmatpush.msra.mxu0 %v1162
    %1192 = vmatpush.msra.mxu0 %v1161
    %1193 = vmatmul.f32.gmra.mxu0 %v1159
    %v1194 = vpop.f32.mrf.mxu0
    %v1195 = vadd.f32 0.0, %v1194
    %1196 = vdwg.mxu0
    %v1197 = vmul.f32 %v1195, 0.125
    %v1198 = vmul.f32 %v1197, %v1197
    %v1200 = vrot.slane %v1198, 6
    %v1202 = vsub.f32 %v1197, %v1200
    %v1203 = vmax.f32 %v1202, 0.0
    %v1204 = vadd.f32 %v1203, 1e-05
    %v1205 = vrsqrt.pop %v1204
    %v1206 = vmul.f32 %v1205, %v1204
    %v1207 = vmul.f32 %v1206, %v1205
    %v1208 = vmul.f32 0.5, %v1207
    %v1209 = vsub.f32 1.5, %v1208
    %v1210 = vmul.f32 %v1205, %v1209
    %vm1211 = vweird.f32 %v1204
    %vm1212 = vweird.f32 %v1205
    %vm1213 = vmor %vm1211, %vm1212
    %v1214 = vsel %vm1213, %v1205, %v1210
    %v1215 = vsel %vm396, %v1197, %v1214
    %v1216 = vld [vmem:[%s47] sm:$0xff]
    %v1217 = vld [vmem:[%s47 + $0x8] sm:$0xff]
    %v1218 = vld [vmem:[%s47 + $0x10] sm:$0xff]
    %v1219 = vld [vmem:[%s47 + $0x18] sm:$0xff]
    %v1221 = vsel %vm354, %v1215, 0
    %1223 = vmatpush.msra.mxu0 0.0
    %1224 = vmatpush.msra.mxu0 0.0
    %1225 = vmatpush.msra.mxu0 0.0
    %1226 = vmatpush.msra.mxu0 0.0
    %1227 = vmatpush.msra.mxu0 0.0
    %1228 = vmatpush.msra.mxu0 0.0
    %1229 = vmatpush.msra.mxu0 0.0
    %1230 = vmatpush.msra.mxu0 0.0
    %1231 = vmatpush.msra.mxu0 0.0
    %1232 = vmatpush.msra.mxu0 0.0
    %1233 = vmatpush.msra.mxu0 0.0
    %1234 = vmatpush.msra.mxu0 0.0
    %1235 = vmatpush.msra.mxu0 %v1219
    %1236 = vmatpush.msra.mxu0 %v1218
    %1237 = vmatpush.msra.mxu0 %v1217
    %1238 = vmatpush.msra.mxu0 %v1216
    %1239 = vmatmul.f32.gmra.mxu0 %v1221
    %v1240 = vpop.f32.mrf.mxu0
    %v1241 = vadd.f32 0.0, %v1240
    %1242 = vdwg.mxu0
    %v1243 = vld [vmem:[%s43] sm:$0xff]
    %v1245 = vsel %vm145, %v1243, 0
    %v1248 = vsel %vm158, %v1241, 0
    %1250 = vmatpush.msra.mxu0 0.0
    %1251 = vmatpush.msra.mxu0 0.0
    %1252 = vmatpush.msra.mxu0 0.0
    %1253 = vmatpush.msra.mxu0 0.0
    %1254 = vmatpush.msra.mxu0 0.0
    %1255 = vmatpush.msra.mxu0 0.0
    %1256 = vmatpush.msra.mxu0 0.0
    %1257 = vmatpush.msra.mxu0 0.0
    %1258 = vmatpush.msra.mxu0 0.0
    %1259 = vmatpush.msra.mxu0 0.0
    %1260 = vmatpush.msra.mxu0 0.0
    %1261 = vmatpush.msra.mxu0 0.0
    %1262 = vmatpush.msra.mxu0 0.0
    %1263 = vmatpush.msra.mxu0 0.0
    %1264 = vmatpush.msra.mxu0 0.0
    %1265 = vmatpush.msra.mxu0 %v1248
    %1266 = vmatmul.f32.gmra.mxu0 %v1245
    %v1267 = vpop.f32.mrf.mxu0
    %v1268 = vadd.f32 0.0, %v1267
    %1269 = vdwg.mxu0
    %v1270 = vsub.f32 %v1129, %v1268
    %v1272 = vrot.slane %v1268, 4
    %v1274 = vmul.f32 %v1270, %v1272
    %v1275 = vld [vmem:[%s49] sm:$0x1]
    %v1277 = vperm.slane %v1275, 0
    %v1279 = vmul.f32 %v1274, %v1277
    %v1280 = vld [vmem:[%s51] sm:$0x1]
    %v1282 = vperm.slane %v1280, 0
    %v1284 = vadd.f32 %v1279, %v1282
    %v1285 = vxor.u32 %v1284, 2147483648
    %v1286 = vmul.f32 %v1285, 1.442695
    %v1287 = vpow.pop %v1286
    %v1288 = vadd.f32 %v1287, 1.0
    %v1289 = vrcp.pop %v1288
    %v1290 = vmul.f32 %v1288, %v1289
    %v1291 = vsub.f32 1.0, %v1290
    %v1292 = vmul.f32 %v1289, %v1291
    %v1293 = vadd.f32 %v1289, %v1292
    %vm1294 = vweird.f32 %v1288
    %vm1295 = vweird.f32 %v1289
    %vm1296 = vmor %vm1294, %vm1295
    %v1297 = vsel %vm1296, %v1289, %v1293
    %v1298 = vand.u32 2147483647, %v1288
    %vm1299 = vcmp.eq.f32.partialorder %v1298, 8.507059e+37
    %v1300 = vand.u32 %v1288, 2147483648
    %v1301 = vor.u32 1.1754944e-38, %v1300
    %v1302 = vsel %vm1299, %v1301, %v1297
    %v1303 = vmul.f32 1.0, %v1302
    %v1304 = vmul.f32 %v1284, %v1303
    %v1305 = vld [vmem:[%s55] sm:$0xff]
    %v1306 = vld [vmem:[%s57] sm:$0x1]
    %v1308 = vperm.slane %v1306, 0
    %v1311 = vsel %vm1137, %v143, 0
    %1313 = vmatpush.msra.mxu0 0.0
    %1314 = vmatpush.msra.mxu0 0.0
    %1315 = vmatpush.msra.mxu0 0.0
    %1316 = vmatpush.msra.mxu0 0.0
    %1317 = vmatpush.msra.mxu0 0.0
    %1318 = vmatpush.msra.mxu0 0.0
    %1319 = vmatpush.msra.mxu0 0.0
    %1320 = vmatpush.msra.mxu0 0.0
    %1321 = vmatpush.msra.mxu0 0.0
    %1322 = vmatpush.msra.mxu0 0.0
    %1323 = vmatpush.msra.mxu0 0.0
    %1324 = vmatpush.msra.mxu0 0.0
    %1325 = vmatpush.msra.mxu0 0.0
    %1326 = vmatpush.msra.mxu0 0.0
    %1327 = vmatpush.msra.mxu0 0.0
    %1328 = vmatpush.msra.mxu0 %v1305
    %1329 = vmatmul.f32.gmra.mxu0 %v1311
    %v1330 = vpop.f32.mrf.mxu0
    %v1331 = vadd.f32 %v1308, %v1330
    %1332 = vdwg.mxu0
    %v1333 = vmax.f32 %v1331, 0.0
    %v1334 = vld [vmem:[%s59] sm:$0xff]
    %v1335 = vld [vmem:[%s59 + $0x8] sm:$0xff]
    %v1336 = vld [vmem:[%s59 + $0x10] sm:$0xff]
    %v1337 = vld [vmem:[%s59 + $0x18] sm:$0xff]
    %v1338 = vld [vmem:[%s59 + $0x20] sm:$0xff]
    %v1339 = vld [vmem:[%s59 + $0x28] sm:$0xff]
    %v1340 = vld [vmem:[%s59 + $0x30] sm:$0xff]
    %v1341 = vld [vmem:[%s59 + $0x38] sm:$0xff]
    %v1342 = vld [vmem:[%s61] sm:$0x1]
    %v1344 = vperm.slane %v1342, 0
    %v1347 = vsel %vm820, %v1333, 0
    %1349 = vmatpush.msra.mxu0 0.0
    %1350 = vmatpush.msra.mxu0 0.0
    %1351 = vmatpush.msra.mxu0 0.0
    %1352 = vmatpush.msra.mxu0 0.0
    %1353 = vmatpush.msra.mxu0 0.0
    %1354 = vmatpush.msra.mxu0 0.0
    %1355 = vmatpush.msra.mxu0 0.0
    %1356 = vmatpush.msra.mxu0 0.0
    %1357 = vmatpush.msra.mxu0 %v1341
    %1358 = vmatpush.msra.mxu0 %v1340
    %1359 = vmatpush.msra.mxu0 %v1339
    %1360 = vmatpush.msra.mxu0 %v1338
    %1361 = vmatpush.msra.mxu0 %v1337
    %1362 = vmatpush.msra.mxu0 %v1336
    %1363 = vmatpush.msra.mxu0 %v1335
    %1364 = vmatpush.msra.mxu0 %v1334
    %1365 = vmatmul.f32.gmra.mxu0 %v1347
    %v1366 = vpop.f32.mrf.mxu0
    %v1367 = vadd.f32 %v1344, %v1366
    %1368 = vdwg.mxu0
    %v1369 = vld [vmem:[%s53] sm:$0x3]
    %v1371 = vsel %vm145, %v1369, 0
    %v1374 = vsel %vm158, %v1304, 0
    %1376 = vmatpush.msra.mxu0 0.0
    %1377 = vmatpush.msra.mxu0 0.0
    %1378 = vmatpush.msra.mxu0 0.0
    %1379 = vmatpush.msra.mxu0 0.0
    %1380 = vmatpush.msra.mxu0 0.0
    %1381 = vmatpush.msra.mxu0 0.0
    %1382 = vmatpush.msra.mxu0 0.0
    %1383 = vmatpush.msra.mxu0 0.0
    %1384 = vmatpush.msra.mxu0 0.0
    %1385 = vmatpush.msra.mxu0 0.0
    %1386 = vmatpush.msra.mxu0 0.0
    %1387 = vmatpush.msra.mxu0 0.0
    %1388 = vmatpush.msra.mxu0 0.0
    %1389 = vmatpush.msra.mxu0 0.0
    %1390 = vmatpush.msra.mxu0 0.0
    %1391 = vmatpush.msra.mxu0 %v1374
    %1392 = vmatmul.f32.gmra.mxu0 %v1371
    %v1393 = vpop.f32.mrf.mxu0
    %v1394 = vadd.f32 0.0, %v1393
    %1395 = vdwg.mxu0
    %s1396 = scalar_lea.vmem %s53, 2
    %v1397 = vld [vmem:[%s1396] sm:$0x3]
    %v1399 = vsel %vm145, %v1397, 0
    %1401 = vmatpush.msra.mxu0 0.0
    %1402 = vmatpush.msra.mxu0 0.0
    %1403 = vmatpush.msra.mxu0 0.0
    %1404 = vmatpush.msra.mxu0 0.0
    %1405 = vmatpush.msra.mxu0 0.0
    %1406 = vmatpush.msra.mxu0 0.0
    %1407 = vmatpush.msra.mxu0 0.0
    %1408 = vmatpush.msra.mxu0 0.0
    %1409 = vmatpush.msra.mxu0 0.0
    %1410 = vmatpush.msra.mxu0 0.0
    %1411 = vmatpush.msra.mxu0 0.0
    %1412 = vmatpush.msra.mxu0 0.0
    %1413 = vmatpush.msra.mxu0 0.0
    %1414 = vmatpush.msra.mxu0 0.0
    %1415 = vmatpush.msra.mxu0 0.0
    %1416 = vmatpush.msra.mxu0 %v1374
    %1417 = vmatmul.f32.gmra.mxu0 %v1399
    %v1418 = vpop.f32.mrf.mxu0
    %v1419 = vadd.f32 0.0, %v1418
    %1420 = vdwg.mxu0
    %v1421 = vld [vmem:[%s63] sm:$0xff]
    %v1422 = vld [vmem:[%s63 + $0x8] sm:$0xff]
    %v1423 = vld [vmem:[%s63 + $0x10] sm:$0xff]
    %v1424 = vld [vmem:[%s63 + $0x18] sm:$0xff]
    %v1425 = vld [vmem:[%s63 + $0x20] sm:$0xff]
    %v1426 = vld [vmem:[%s63 + $0x28] sm:$0xff]
    %v1427 = vld [vmem:[%s63 + $0x30] sm:$0xff]
    %v1428 = vld [vmem:[%s63 + $0x38] sm:$0xff]
    %v1429 = vld [vmem:[%s63 + $0x40] sm:$0xff]
    %v1430 = vld [vmem:[%s63 + $0x48] sm:$0xff]
    %v1431 = vld [vmem:[%s63 + $0x50] sm:$0xff]
    %v1432 = vld [vmem:[%s63 + $0x58] sm:$0xff]
    %v1433 = vld [vmem:[%s63 + $0x60] sm:$0xff]
    %v1434 = vld [vmem:[%s63 + $0x68] sm:$0xff]
    %v1435 = vld [vmem:[%s63 + $0x70] sm:$0xff]
    %v1436 = vld [vmem:[%s63 + $0x78] sm:$0xff]
    %v1437 = vld [vmem:[%s63 + $0x80] sm:$0xff]
    %v1438 = vld [vmem:[%s63 + $0x88] sm:$0xff]
    %v1439 = vld [vmem:[%s63 + $0x90] sm:$0xff]
    %v1440 = vld [vmem:[%s63 + $0x98] sm:$0xff]
    %v1441 = vld [vmem:[%s63 + $0xa0] sm:$0xff]
    %v1442 = vld [vmem:[%s63 + $0xa8] sm:$0xff]
    %v1443 = vld [vmem:[%s63 + $0xb0] sm:$0xff]
    %v1444 = vld [vmem:[%s63 + $0xb8] sm:$0xff]
    %v1445 = vld [vmem:[%s63 + $0xc0] sm:$0xff]
    %v1446 = vld [vmem:[%s63 + $0xc8] sm:$0xff]
    %v1447 = vld [vmem:[%s63 + $0xd0] sm:$0xff]
    %v1448 = vld [vmem:[%s63 + $0xd8] sm:$0xff]
    %v1449 = vld [vmem:[%s63 + $0xe0] sm:$0xff]
    %v1450 = vld [vmem:[%s63 + $0xe8] sm:$0xff]
    %v1451 = vld [vmem:[%s63 + $0xf0] sm:$0xff]
    %v1452 = vld [vmem:[%s63 + $0xf8] sm:$0xff]
    %v1453 = vld [vmem:[%s63 + $0x100] sm:$0xff]
    %v1454 = vld [vmem:[%s63 + $0x108] sm:$0xff]
    %v1455 = vld [vmem:[%s63 + $0x110] sm:$0xff]
    %v1456 = vld [vmem:[%s63 + $0x118] sm:$0xff]
    %v1457 = vld [vmem:[%s65] sm:$0x1]
    %v1459 = vperm.slane %v1457, 0
    %v1462 = vsel %vm354, %v1367, 0
    %1464 = vmatpush.msra.mxu0 %v1436
    %1465 = vmatpush.msra.mxu0 %v1435
    %1466 = vmatpush.msra.mxu0 %v1434
    %1467 = vmatpush.msra.mxu0 %v1433
    %1468 = vmatpush.msra.mxu0 %v1432
    %1469 = vmatpush.msra.mxu0 %v1431
    %1470 = vmatpush.msra.mxu0 %v1430
    %1471 = vmatpush.msra.mxu0 %v1429
    %1472 = vmatpush.msra.mxu0 %v1428
    %1473 = vmatpush.msra.mxu0 %v1427
    %1474 = vmatpush.msra.mxu0 %v1426
    %1475 = vmatpush.msra.mxu0 %v1425
    %1476 = vmatpush.msra.mxu0 %v1424
    %1477 = vmatpush.msra.mxu0 %v1423
    %1478 = vmatpush.msra.mxu0 %v1422
    %1479 = vmatpush.msra.mxu0 %v1421
    %1480 = vmatmul.f32.gmra.mxu0 %v1394
    %v1481 = vpop.f32.mrf.mxu0
    %v1482 = vadd.f32 %v1459, %v1481
    %1483 = vdwg.mxu0
    %1484 = vmatpush.msra.mxu0 %v1452
    %1485 = vmatpush.msra.mxu0 %v1451
    %1486 = vmatpush.msra.mxu0 %v1450
    %1487 = vmatpush.msra.mxu0 %v1449
    %1488 = vmatpush.msra.mxu0 %v1448
    %1489 = vmatpush.msra.mxu0 %v1447
    %1490 = vmatpush.msra.mxu0 %v1446
    %1491 = vmatpush.msra.mxu0 %v1445
    %1492 = vmatpush.msra.mxu0 %v1444
    %1493 = vmatpush.msra.mxu0 %v1443
    %1494 = vmatpush.msra.mxu0 %v1442
    %1495 = vmatpush.msra.mxu0 %v1441
    %1496 = vmatpush.msra.mxu0 %v1440
    %1497 = vmatpush.msra.mxu0 %v1439
    %1498 = vmatpush.msra.mxu0 %v1438
    %1499 = vmatpush.msra.mxu0 %v1437
    %1500 = vmatmul.f32.gmra.mxu0 %v1419
    %v1501 = vpop.f32.mrf.mxu0
    %v1502 = vadd.f32 %v1482, %v1501
    %1503 = vdwg.mxu0
    %1504 = vmatpush.msra.mxu0 0.0
    %1505 = vmatpush.msra.mxu0 0.0
    %1506 = vmatpush.msra.mxu0 0.0
    %1507 = vmatpush.msra.mxu0 0.0
    %1508 = vmatpush.msra.mxu0 0.0
    %1509 = vmatpush.msra.mxu0 0.0
    %1510 = vmatpush.msra.mxu0 0.0
    %1511 = vmatpush.msra.mxu0 0.0
    %1512 = vmatpush.msra.mxu0 0.0
    %1513 = vmatpush.msra.mxu0 0.0
    %1514 = vmatpush.msra.mxu0 0.0
    %1515 = vmatpush.msra.mxu0 0.0
    %1516 = vmatpush.msra.mxu0 %v1456
    %1517 = vmatpush.msra.mxu0 %v1455
    %1518 = vmatpush.msra.mxu0 %v1454
    %1519 = vmatpush.msra.mxu0 %v1453
    %1520 = vmatmul.f32.gmra.mxu0 %v1462
    %v1521 = vpop.f32.mrf.mxu0
    %v1522 = vadd.f32 %v1502, %v1521
    %1523 = vdwg.mxu0
    %vm1524 = vcmask 254976
    %1525 = vst.msk [vmem:[#allocation2] sm:$0x3] %vm1524, %v1522
    // Predicated region
    $region134: #{tpu_custom_call.1} parent=1 // pred_check
      _
    $region135: #{tpu_custom_call.1} parent=1 // pred_check_branch
      %1527 = sbr.rel (0) target = $region137
    $region136: #{tpu_custom_call.1} parent=1 // pred_region
      %1529 = vsyncadd [#allocation3], 0
      %s1531 = sshll.u32 [#allocation2], 4
      %s1532 = int_to_ptr.vmem [resolvable:$true] %s1531
      %s1533 = sshll.u32 %s67, 4
      %s1534 = int_to_ptr.hbm [resolvable:$true] %s1533
      %1536 = dma.vmem_to_hbm [thread:$0]  %s1532, 32, %s1534, [#allocation3]
    $region137: #{tpu_custom_call.1} parent=1 // pred_fallthru
      _
    // Predicated region
    $region138: #{tpu_custom_call.1} parent=1 // pred_check
      _
    $region139: #{tpu_custom_call.1} parent=1 // pred_check_branch
      %1538 = sbr.rel (0) target = $region141
    $region140: #{tpu_custom_call.1} parent=1 // pred_region
      %1540 = dma.done [#allocation3], 32
    $region141: #{tpu_custom_call.1} parent=1 // pred_fallthru
      _
    %1541 = vsyncpa [#allocation3], 1

</llo_original>
